<compile_context>
chip_gen: v6e
topology: v6e:2x2x1
jax: 0.10.0
libtpu: 0.0.40
codegen_flags: <defaults>
</compile_context>

<pallas_src>
import functools
import math

import numpy as np
import jax
import jax.numpy as jnp
from jax import lax
from jax.experimental import pallas as pl
from jax.experimental.pallas import tpu as pltpu

_LOG_SQRT_2PI = math.log(math.sqrt(2.0 * math.pi))


# --------------------------------------------------------------------------
# Kernel 1 (per batch element): fused softmax + first/second moment sufficient
# statistics in one streaming pass over the K raw-reshape groups.
# --------------------------------------------------------------------------
def _stats_std_kernel(z_ref, xg_ref, xresh_ref, gamma_ref, m_ref, std_ref, *,
                      num_clusters):
    K = num_clusters

    mr_list = []                                   # per-r (K, 4): [msum_r | ssum_r]
    a_list = [[None] * K for _ in range(3)]        # A_c[k', r]  as (K, 1)
    q_list = [None, None, None]                    # Q_c[k']     as (K, 1)

    # ---- single pass over groups r: softmax + all statistics --------------
    for r in range(K):
        zr = z_ref[0, r * K:(r + 1) * K, :]                     # (K, G)
        zmax = jnp.max(zr, axis=0, keepdims=True)               # (1, G)
        ez = jnp.exp(zr - zmax)
        gr = ez / jnp.sum(ez, axis=0, keepdims=True)            # (K, G)
        gamma_ref[0, r * K:(r + 1) * K, :] = gr                 # write gamma once

        # MXU: (K, G) x (4, G)^T -> (K, 4); col 0..2 = sum g*x_c, col 3 = sum g
        xr = xg_ref[0, r * 4:(r + 1) * 4, :]                    # (4, G)
        mr_list.append(lax.dot_general(
            gr, xr, (((1,), (1,)), ((), ())),
            preferred_element_type=jnp.float32))

        # second-moment sufficient statistics (gamma still live in vregs)
        for c in range(3):
            xc = xresh_ref[0, c * K:(c + 1) * K, :]             # (K, G)
            prod = gr * xc
            a_list[c][r] = jnp.sum(prod, axis=1, keepdims=True)         # (K, 1)
            qc = jnp.sum(prod * xc, axis=1, keepdims=True)              # (K, 1)
            q_list[c] = qc if q_list[c] is None else q_list[c] + qc

    # ---- epilogue: means and stds (tiny (K, *) math only) ------------------
    msum = sum(mr[:, 0:3] for mr in mr_list)                    # (K, 3)
    ssum = sum(mr[:, 3:4] for mr in mr_list)                    # (K, 1)
    s = ssum + 1e-7
    mval = msum / s                                             # (K, 3) M_c[k]
    m_ref[0] = mval

    # SS_c[k'] = Q_c[k'] - 2 * sum_r M_c[r]*A_c[k',r] + sum_r M_c[r]^2*ssum_r[k']
    std_cols = []
    for c in range(3):
        cross = jnp.zeros((K, 1), jnp.float32)
        quad = jnp.zeros((K, 1), jnp.float32)
        for r in range(K):
            m_rc = mval[r:r + 1, c:c + 1]                       # (1, 1)
            cross = cross + m_rc * a_list[c][r]
            quad = quad + (m_rc * m_rc) * mr_list[r][:, 3:4]
        ss = jnp.maximum(q_list[c] - 2.0 * cross + quad, 0.0)   # guard rounding
        std_cols.append(jnp.sqrt(ss / s))                       # (K, 1)
    std_ref[0] = jnp.concatenate(std_cols, axis=1)              # (K, 3)


# --------------------------------------------------------------------------
# Kernel 2 (per batch element): per-pixel mixture log-probability.
#   mean_c log N(x_c; loc, scale) = cmat[k, :6] . [x^2 ; x] + cmat[k, 6]
# with coefficients hoisted to the wrapper (no divides/logs in the hot loop).
# --------------------------------------------------------------------------
def _logprob_kernel(gamma_ref, xg_ref, c_ref, out_ref, *, num_clusters):
    K = num_clusters
    cmat = c_ref[0]                                             # (K, 7)
    c6 = cmat[:, 0:6]                                           # [a_0..2 | b_0..2]
    cc = cmat[:, 6:7]                                           # constants (K, 1)

    acc = jnp.zeros((1, 1), jnp.float32)
    for r in range(K):
        xr = xg_ref[0, r * 4:r * 4 + 3, :]                      # (3, G) x channels
        gr = gamma_ref[0, r * K:(r + 1) * K, :]                 # (K, G)
        st = jnp.concatenate([xr * xr, xr], axis=0)             # (6, G)
        mlp = jnp.dot(c6, st, preferred_element_type=jnp.float32) + cc  # (K, G)
        psum = jnp.sum(jnp.exp(mlp) * gr, axis=0, keepdims=True)        # (1, G)
        prob = jnp.minimum(psum + 1e-7, 1.0)
        acc = acc + jnp.sum(jnp.log(prob), axis=1, keepdims=True)       # (1, 1)
    out_ref[0] = acc


# --------------------------------------------------------------------------
# Wrapper (glue: layout transposes / tiny parameter plumbing only)
# --------------------------------------------------------------------------
def gmm_forward(z, x_hsd, *, num_clusters, img_size):
    B = z.shape[0]
    K = num_clusters
    HW = img_size * img_size
    assert HW % K == 0, "raw-reshape pairing requires num_clusters | H*W"
    G = HW // K
    # NOTE: for fully lane-dense stores G should be a multiple of 128 (true
    # for realistic img_size, e.g. 256x256 / K=4 -> G = 16384); small test
    # shapes (G = 64) simply use masked lanes.

    zf = z.reshape(B, K, HW).astype(jnp.float32)
    x = x_hsd.reshape(B, 3, HW).astype(jnp.float32)

    # grouped, sublane-flattened layouts (pixel n = m*K + r):
    # TODO(synk): z_g / x_g are materialized HBM copies (XLA transposes, done
    # once); on HBM-bound v5e a fused-producer (allow_input_fusion) or an
    # in-kernel regroup would remove one full-image copy.
    z_g = jnp.transpose(zf.reshape(B, K, G, K), (0, 3, 1, 2)).reshape(B, K * K, G)
    x_grp = jnp.transpose(x.reshape(B, 3, G, K), (0, 3, 1, 2))        # (B, K, 3, G)
    ones = jnp.ones((B, K, 1, G), jnp.float32)
    x_g = jnp.concatenate([x_grp, ones], axis=2).reshape(B, 4 * K, G)  # ones row -> ssum via MXU
    x_resh = x.reshape(B, 3 * K, G)                                    # free metadata reshape

    # VMEM limit: padded, double-buffered block bytes + headroom, well below
    # v7x's 64 MiB physical VMEM (never request the full capacity).
    lanes_pad = ((G + 127) // 128) * 128
    pad8 = lambda rows: ((rows + 7) // 8) * 8
    blk1 = (2 * pad8(K * K) + pad8(4 * K) + pad8(3 * K)) * lanes_pad * 4
    blk2 = (pad8(K * K) + pad8(4 * K)) * lanes_pad * 4
    vmem_limit = lambda blk: int(min(56 << 20, max(24 << 20, 2 * blk + (8 << 20))))

    # TODO(synk): with B == 1 on v7x a second "parallel" grid axis over G (or
    # core_map over HW) would be needed to feed both TensorCores.
    cparams1 = pltpu.CompilerParams(dimension_semantics=("parallel",),
                                    vmem_limit_bytes=vmem_limit(blk1))
    cparams2 = pltpu.CompilerParams(dimension_semantics=("parallel",),
                                    vmem_limit_bytes=vmem_limit(blk2))

    gamma_g, M_out, std_out = pl.pallas_call(
        functools.partial(_stats_std_kernel, num_clusters=K),
        out_shape=(jax.ShapeDtypeStruct((B, K * K, G), jnp.float32),
                   jax.ShapeDtypeStruct((B, K, 3), jnp.float32),
                   jax.ShapeDtypeStruct((B, K, 3), jnp.float32)),
        grid=(B,),
        in_specs=[pl.BlockSpec((1, K * K, G), lambda b: (b, 0, 0)),
                  pl.BlockSpec((1, 4 * K, G), lambda b: (b, 0, 0)),
                  pl.BlockSpec((1, 3 * K, G), lambda b: (b, 0, 0))],
        out_specs=(pl.BlockSpec((1, K * K, G), lambda b: (b, 0, 0)),
                   pl.BlockSpec((1, K, 3), lambda b: (b, 0, 0)),
                   pl.BlockSpec((1, K, 3), lambda b: (b, 0, 0))),
        compiler_params=cparams1,
    )(z_g, x_g, x_resh)

    M_t = jnp.transpose(M_out, (0, 2, 1))        # (B, 3, K)
    std_t = jnp.transpose(std_out, (0, 2, 1))    # (B, 3, K)

    # self.mu / self.std : cat along dim 0 -> (3B, K)
    mu = jnp.concatenate([M_t[:, 0, :], M_t[:, 1, :], M_t[:, 2, :]], axis=0)
    std = jnp.concatenate([std_t[:, 0, :], std_t[:, 1, :], std_t[:, 2, :]], axis=0)

    # Faithful reproduction of torch cat(dim=0) + reshape(-1,3,1,1) (mixes
    # batches when B > 1): loc[b, c, k] = mu[3b + c, k].
    loc = mu.reshape(B, 3, K)
    scale = std.reshape(B, 3, K)

    # hoisted per-cluster coefficients for mean-over-channels log N(x):
    #   mean_c logp = sum_c (-x_c^2/(6 s^2) + x_c*loc/(3 s^2))
    #                 + sum_c (-loc^2/(6 s^2) - log(s)/3) - log(sqrt(2 pi))
    inv6 = 1.0 / (6.0 * scale * scale)                      # (B, 3, K)
    coef_a = -inv6
    coef_b = 2.0 * loc * inv6
    coef_c = (jnp.sum(-loc * loc * inv6 - jnp.log(scale) / 3.0,
                      axis=1, keepdims=True) - _LOG_SQRT_2PI)   # (B, 1, K)
    cmat = jnp.transpose(jnp.concatenate([coef_a, coef_b, coef_c], axis=1),
                         (0, 2, 1))                              # (B, K, 7)

    # TODO(synk): for B == 1 (no cross-batch loc/scale mixing) the log-prob
    # pass could be fused into kernel 1, saving the gamma HBM round trip.
    partials = pl.pallas_call(
        functools.partial(_logprob_kernel, num_clusters=K),
        out_shape=jax.ShapeDtypeStruct((B, 1, 1), jnp.float32),
        grid=(B,),
        in_specs=[pl.BlockSpec((1, K * K, G), lambda b: (b, 0, 0)),
                  pl.BlockSpec((1, 4 * K, G), lambda b: (b, 0, 0)),
                  pl.BlockSpec((1, K, 7), lambda b: (b, 0, 0))],
        out_specs=pl.BlockSpec((1, 1, 1), lambda b: (b, 0, 0)),
        compiler_params=cparams2,
    )(gamma_g, x_g, cmat)

    log_prob = jnp.sum(partials)

    # gamma.permute(0, 2, 3, 1): gamma_g[b, r*K+k, m] = gamma[b, k, m*K + r]
    gamma_perm = jnp.transpose(gamma_g.reshape(B, K, K, G),
                               (0, 3, 1, 2)).reshape(B, img_size, img_size, K)
    return log_prob, (mu, std, gamma_perm)


# --------------------------------------------------------------------------
# Pure-JAX reference mirroring the PyTorch forward (for correctness check)
# --------------------------------------------------------------------------
def reference(z, x_hsd, K, img):
    x = x_hsd.reshape(-1, 3, img, img)
    gamma = jax.nn.softmax(z, axis=1)
    D, h, s_ = x[:, 0:1], x[:, 1:2], x[:, 2:3]
    S = jnp.sum(gamma, axis=(2, 3)) + 1e-7
    M_d = jnp.sum(gamma * D, axis=(2, 3)) / S
    M_a = jnp.sum(gamma * h, axis=(2, 3)) / S
    M_b = jnp.sum(gamma * s_, axis=(2, 3)) / S
    mu = jnp.concatenate([M_d, M_a, M_b], axis=0)
    Norm_d = (D.reshape(-1, img, img, 1) - M_d.reshape(-1, 1, 1, K)) ** 2
    Norm_h = (h.reshape(-1, img, img, 1) - M_a.reshape(-1, 1, 1, K)) ** 2
    Norm_s = (s_.reshape(-1, img, img, 1) - M_b.reshape(-1, 1, 1, K)) ** 2
    S_d = jnp.sqrt(jnp.sum(gamma * Norm_d.reshape(-1, K, img, img), axis=(2, 3)) / S)
    S_h = jnp.sqrt(jnp.sum(gamma * Norm_h.reshape(-1, K, img, img), axis=(2, 3)) / S)
    S_s = jnp.sqrt(jnp.sum(gamma * Norm_s.reshape(-1, K, img, img), axis=(2, 3)) / S)
    std = jnp.concatenate([S_d, S_h, S_s], axis=0)
    probs = []
    for k in range(K):
        loc_k = mu[:, k].reshape(-1, 3, 1, 1)
        scale_k = std[:, k].reshape(-1, 3, 1, 1)
        logp = (-((x - loc_k) ** 2) / (2 * scale_k ** 2)
                - jnp.log(scale_k) - math.log(math.sqrt(2 * math.pi)))
        probs.append(jnp.exp(jnp.mean(logp, axis=1)) * jnp.squeeze(gamma[:, k:k + 1]))
    prob = jnp.minimum(jnp.sum(jnp.stack(probs), axis=0) + 1e-7, 1.0)
    return (jnp.sum(jnp.log(prob)), mu, std, jnp.transpose(gamma, (0, 2, 3, 1)))


if __name__ == "__main__":
    B, K, IMG = 2, 4, 16
    key = jax.random.PRNGKey(0)
    kz, kx = jax.random.split(key)
    z = jax.random.normal(kz, (B, K, IMG, IMG), dtype=jnp.float32)
    x_hsd = jax.random.normal(kx, (B, 3, IMG, IMG), dtype=jnp.float32)

    fwd = jax.jit(functools.partial(gmm_forward, num_clusters=K, img_size=IMG))
    log_prob, (mu, std, gamma_perm) = fwd(z, x_hsd)
    jax.block_until_ready((log_prob, mu, std, gamma_perm))

    ref_lp, ref_mu, ref_std, ref_gp = reference(z, x_hsd, K, IMG)
    np.testing.assert_allclose(np.asarray(log_prob), np.asarray(ref_lp), rtol=1e-4, atol=1e-3)
    np.testing.assert_allclose(np.asarray(mu), np.asarray(ref_mu), rtol=1e-4, atol=1e-4)
    np.testing.assert_allclose(np.asarray(std), np.asarray(ref_std), rtol=1e-4, atol=1e-4)
    np.testing.assert_allclose(np.asarray(gamma_perm), np.asarray(ref_gp), rtol=1e-5, atol=1e-5)
    print("KERNEL_OK")
</pallas_src>

<mosaic_0001>
module attributes {stable_mosaic.version = 11 : i64} {
  func.func @_stats_std_kernel(%arg0: i32, %arg1: memref<1x16x64xf32, #tpu.memory_space<vmem>>, %arg2: memref<1x16x64xf32, #tpu.memory_space<vmem>>, %arg3: memref<1x12x64xf32, #tpu.memory_space<vmem>>, %arg4: memref<1x16x64xf32, #tpu.memory_space<vmem>>, %arg5: memref<1x4x3xf32, #tpu.memory_space<vmem>>, %arg6: memref<1x4x3xf32, #tpu.memory_space<vmem>>) attributes {dimension_semantics = [#tpu.dimension_semantics<parallel>], iteration_bounds = array<i64: 2>, scalar_prefetch = 0 : i64, scratch_operands = 0 : i64, tpu.core_type = #tpu.core_type<tc>, window_params = [{transform_indices = @transform_0, window_bounds = array<i64: 1, 16, 64>}, {transform_indices = @transform_1, window_bounds = array<i64: 1, 16, 64>}, {transform_indices = @transform_2, window_bounds = array<i64: 1, 12, 64>}, {transform_indices = @transform_3, window_bounds = array<i64: 1, 16, 64>}, {transform_indices = @transform_4, window_bounds = array<i64: 1, 4, 3>}, {transform_indices = @transform_5, window_bounds = array<i64: 1, 4, 3>}]} {
    %c0 = arith.constant 0 : index
    %c0_0 = arith.constant 0 : index
    %c0_1 = arith.constant 0 : index
    %0 = vector.load %arg1[%c0, %c0_0, %c0_1] : memref<1x16x64xf32, #tpu.memory_space<vmem>>, vector<1x4x64xf32>
    %1 = vector.shape_cast %0 : vector<1x4x64xf32> to vector<4x64xf32>
    %cst = arith.constant dense<0xFF800000> : vector<64xf32>
    %2 = vector.multi_reduction <maximumf>, %1, %cst [0] : vector<4x64xf32> to vector<64xf32>
    %3 = vector.shape_cast %2 : vector<64xf32> to vector<1x64xf32>
    %4 = vector.broadcast %3 : vector<1x64xf32> to vector<4x64xf32>
    %5 = arith.subf %1, %4 : vector<4x64xf32>
    %6 = math.exp %5 : vector<4x64xf32>
    %cst_2 = arith.constant dense<0.000000e+00> : vector<64xf32>
    %7 = vector.multi_reduction <add>, %6, %cst_2 [0] : vector<4x64xf32> to vector<64xf32>
    %8 = vector.shape_cast %7 : vector<64xf32> to vector<1x64xf32>
    %9 = vector.broadcast %8 : vector<1x64xf32> to vector<4x64xf32>
    %10 = arith.divf %6, %9 : vector<4x64xf32>
    %c0_3 = arith.constant 0 : index
    %c0_4 = arith.constant 0 : index
    %c0_5 = arith.constant 0 : index
    %11 = vector.load %arg4[%c0_3, %c0_4, %c0_5] : memref<1x16x64xf32, #tpu.memory_space<vmem>>, vector<1x4x64xf32>
    %12 = vector.shape_cast %11 : vector<1x4x64xf32> to vector<4x64xf32>
    %13 = vector.shape_cast %10 : vector<4x64xf32> to vector<1x4x64xf32>
    tpu.vector_store %arg4[%c0_3, %c0_4, %c0_5], %13 {strides = array<i32>} : memref<1x16x64xf32, #tpu.memory_space<vmem>>, vector<1x4x64xf32>,
    %c0_6 = arith.constant 0 : index
    %c0_7 = arith.constant 0 : index
    %c0_8 = arith.constant 0 : index
    %14 = vector.load %arg2[%c0_6, %c0_7, %c0_8] : memref<1x16x64xf32, #tpu.memory_space<vmem>>, vector<1x4x64xf32>
    %15 = vector.shape_cast %14 : vector<1x4x64xf32> to vector<4x64xf32>
    %cst_9 = arith.constant dense<0.000000e+00> : vector<4x4xf32>
    %16 = tpu.matmul %10, %15, %cst_9 {dimension_numbers = #tpu.dot_dimension_numbers<[1], [1], [0], [0], [0, 0, 1, 0], [], []>} : vector<4x64xf32>, vector<4x64xf32>, vector<4x4xf32> -> vector<4x4xf32>
    %c0_10 = arith.constant 0 : index
    %c0_11 = arith.constant 0 : index
    %c0_12 = arith.constant 0 : index
    %17 = vector.load %arg3[%c0_10, %c0_11, %c0_12] : memref<1x12x64xf32, #tpu.memory_space<vmem>>, vector<1x4x64xf32>
    %18 = vector.shape_cast %17 : vector<1x4x64xf32> to vector<4x64xf32>
    %19 = arith.mulf %10, %18 : vector<4x64xf32>
    %cst_13 = arith.constant dense<0.000000e+00> : vector<4xf32>
    %20 = vector.multi_reduction <add>, %19, %cst_13 [1] : vector<4x64xf32> to vector<4xf32>
    %21 = vector.shape_cast %20 : vector<4xf32> to vector<4x1xf32>
    %22 = arith.mulf %19, %18 : vector<4x64xf32>
    %cst_14 = arith.constant dense<0.000000e+00> : vector<4xf32>
    %23 = vector.multi_reduction <add>, %22, %cst_14 [1] : vector<4x64xf32> to vector<4xf32>
    %24 = vector.shape_cast %23 : vector<4xf32> to vector<4x1xf32>
    %c0_15 = arith.constant 0 : index
    %c4 = arith.constant 4 : index
    %c0_16 = arith.constant 0 : index
    %25 = vector.load %arg3[%c0_15, %c4, %c0_16] : memref<1x12x64xf32, #tpu.memory_space<vmem>>, vector<1x4x64xf32>
    %26 = vector.shape_cast %25 : vector<1x4x64xf32> to vector<4x64xf32>
    %27 = arith.mulf %10, %26 : vector<4x64xf32>
    %cst_17 = arith.constant dense<0.000000e+00> : vector<4xf32>
    %28 = vector.multi_reduction <add>, %27, %cst_17 [1] : vector<4x64xf32> to vector<4xf32>
    %29 = vector.shape_cast %28 : vector<4xf32> to vector<4x1xf32>
    %30 = arith.mulf %27, %26 : vector<4x64xf32>
    %cst_18 = arith.constant dense<0.000000e+00> : vector<4xf32>
    %31 = vector.multi_reduction <add>, %30, %cst_18 [1] : vector<4x64xf32> to vector<4xf32>
    %32 = vector.shape_cast %31 : vector<4xf32> to vector<4x1xf32>
    %c0_19 = arith.constant 0 : index
    %c8 = arith.constant 8 : index
    %c0_20 = arith.constant 0 : index
    %33 = vector.load %arg3[%c0_19, %c8, %c0_20] : memref<1x12x64xf32, #tpu.memory_space<vmem>>, vector<1x4x64xf32>
    %34 = vector.shape_cast %33 : vector<1x4x64xf32> to vector<4x64xf32>
    %35 = arith.mulf %10, %34 : vector<4x64xf32>
    %cst_21 = arith.constant dense<0.000000e+00> : vector<4xf32>
    %36 = vector.multi_reduction <add>, %35, %cst_21 [1] : vector<4x64xf32> to vector<4xf32>
    %37 = vector.shape_cast %36 : vector<4xf32> to vector<4x1xf32>
    %38 = arith.mulf %35, %34 : vector<4x64xf32>
    %cst_22 = arith.constant dense<0.000000e+00> : vector<4xf32>
    %39 = vector.multi_reduction <add>, %38, %cst_22 [1] : vector<4x64xf32> to vector<4xf32>
    %40 = vector.shape_cast %39 : vector<4xf32> to vector<4x1xf32>
    %c0_23 = arith.constant 0 : index
    %c4_24 = arith.constant 4 : index
    %c0_25 = arith.constant 0 : index
    %41 = vector.load %arg1[%c0_23, %c4_24, %c0_25] : memref<1x16x64xf32, #tpu.memory_space<vmem>>, vector<1x4x64xf32>
    %42 = vector.shape_cast %41 : vector<1x4x64xf32> to vector<4x64xf32>
    %cst_26 = arith.constant dense<0xFF800000> : vector<64xf32>
    %43 = vector.multi_reduction <maximumf>, %42, %cst_26 [0] : vector<4x64xf32> to vector<64xf32>
    %44 = vector.shape_cast %43 : vector<64xf32> to vector<1x64xf32>
    %45 = vector.broadcast %44 : vector<1x64xf32> to vector<4x64xf32>
    %46 = arith.subf %42, %45 : vector<4x64xf32>
    %47 = math.exp %46 : vector<4x64xf32>
    %cst_27 = arith.constant dense<0.000000e+00> : vector<64xf32>
    %48 = vector.multi_reduction <add>, %47, %cst_27 [0] : vector<4x64xf32> to vector<64xf32>
    %49 = vector.shape_cast %48 : vector<64xf32> to vector<1x64xf32>
    %50 = vector.broadcast %49 : vector<1x64xf32> to vector<4x64xf32>
    %51 = arith.divf %47, %50 : vector<4x64xf32>
    %c0_28 = arith.constant 0 : index
    %c4_29 = arith.constant 4 : index
    %c0_30 = arith.constant 0 : index
    %52 = vector.load %arg4[%c0_28, %c4_29, %c0_30] : memref<1x16x64xf32, #tpu.memory_space<vmem>>, vector<1x4x64xf32>
    %53 = vector.shape_cast %52 : vector<1x4x64xf32> to vector<4x64xf32>
    %54 = vector.shape_cast %51 : vector<4x64xf32> to vector<1x4x64xf32>
    tpu.vector_store %arg4[%c0_28, %c4_29, %c0_30], %54 {strides = array<i32>} : memref<1x16x64xf32, #tpu.memory_space<vmem>>, vector<1x4x64xf32>,
    %c0_31 = arith.constant 0 : index
    %c4_32 = arith.constant 4 : index
    %c0_33 = arith.constant 0 : index
    %55 = vector.load %arg2[%c0_31, %c4_32, %c0_33] : memref<1x16x64xf32, #tpu.memory_space<vmem>>, vector<1x4x64xf32>
    %56 = vector.shape_cast %55 : vector<1x4x64xf32> to vector<4x64xf32>
    %cst_34 = arith.constant dense<0.000000e+00> : vector<4x4xf32>
    %57 = tpu.matmul %51, %56, %cst_34 {dimension_numbers = #tpu.dot_dimension_numbers<[1], [1], [0], [0], [0, 0, 1, 0], [], []>} : vector<4x64xf32>, vector<4x64xf32>, vector<4x4xf32> -> vector<4x4xf32>
    %c0_35 = arith.constant 0 : index
    %c0_36 = arith.constant 0 : index
    %c0_37 = arith.constant 0 : index
    %58 = vector.load %arg3[%c0_35, %c0_36, %c0_37] : memref<1x12x64xf32, #tpu.memory_space<vmem>>, vector<1x4x64xf32>
    %59 = vector.shape_cast %58 : vector<1x4x64xf32> to vector<4x64xf32>
    %60 = arith.mulf %51, %59 : vector<4x64xf32>
    %cst_38 = arith.constant dense<0.000000e+00> : vector<4xf32>
    %61 = vector.multi_reduction <add>, %60, %cst_38 [1] : vector<4x64xf32> to vector<4xf32>
    %62 = vector.shape_cast %61 : vector<4xf32> to vector<4x1xf32>
    %63 = arith.mulf %60, %59 : vector<4x64xf32>
    %cst_39 = arith.constant dense<0.000000e+00> : vector<4xf32>
    %64 = vector.multi_reduction <add>, %63, %cst_39 [1] : vector<4x64xf32> to vector<4xf32>
    %65 = vector.shape_cast %64 : vector<4xf32> to vector<4x1xf32>
    %66 = arith.addf %24, %65 : vector<4x1xf32>
    %c0_40 = arith.constant 0 : index
    %c4_41 = arith.constant 4 : index
    %c0_42 = arith.constant 0 : index
    %67 = vector.load %arg3[%c0_40, %c4_41, %c0_42] : memref<1x12x64xf32, #tpu.memory_space<vmem>>, vector<1x4x64xf32>
    %68 = vector.shape_cast %67 : vector<1x4x64xf32> to vector<4x64xf32>
    %69 = arith.mulf %51, %68 : vector<4x64xf32>
    %cst_43 = arith.constant dense<0.000000e+00> : vector<4xf32>
    %70 = vector.multi_reduction <add>, %69, %cst_43 [1] : vector<4x64xf32> to vector<4xf32>
    %71 = vector.shape_cast %70 : vector<4xf32> to vector<4x1xf32>
    %72 = arith.mulf %69, %68 : vector<4x64xf32>
    %cst_44 = arith.constant dense<0.000000e+00> : vector<4xf32>
    %73 = vector.multi_reduction <add>, %72, %cst_44 [1] : vector<4x64xf32> to vector<4xf32>
    %74 = vector.shape_cast %73 : vector<4xf32> to vector<4x1xf32>
    %75 = arith.addf %32, %74 : vector<4x1xf32>
    %c0_45 = arith.constant 0 : index
    %c8_46 = arith.constant 8 : index
    %c0_47 = arith.constant 0 : index
    %76 = vector.load %arg3[%c0_45, %c8_46, %c0_47] : memref<1x12x64xf32, #tpu.memory_space<vmem>>, vector<1x4x64xf32>
    %77 = vector.shape_cast %76 : vector<1x4x64xf32> to vector<4x64xf32>
    %78 = arith.mulf %51, %77 : vector<4x64xf32>
    %cst_48 = arith.constant dense<0.000000e+00> : vector<4xf32>
    %79 = vector.multi_reduction <add>, %78, %cst_48 [1] : vector<4x64xf32> to vector<4xf32>
    %80 = vector.shape_cast %79 : vector<4xf32> to vector<4x1xf32>
    %81 = arith.mulf %78, %77 : vector<4x64xf32>
    %cst_49 = arith.constant dense<0.000000e+00> : vector<4xf32>
    %82 = vector.multi_reduction <add>, %81, %cst_49 [1] : vector<4x64xf32> to vector<4xf32>
    %83 = vector.shape_cast %82 : vector<4xf32> to vector<4x1xf32>
    %84 = arith.addf %40, %83 : vector<4x1xf32>
    %c0_50 = arith.constant 0 : index
    %c8_51 = arith.constant 8 : index
    %c0_52 = arith.constant 0 : index
    %85 = vector.load %arg1[%c0_50, %c8_51, %c0_52] : memref<1x16x64xf32, #tpu.memory_space<vmem>>, vector<1x4x64xf32>
    %86 = vector.shape_cast %85 : vector<1x4x64xf32> to vector<4x64xf32>
    %cst_53 = arith.constant dense<0xFF800000> : vector<64xf32>
    %87 = vector.multi_reduction <maximumf>, %86, %cst_53 [0] : vector<4x64xf32> to vector<64xf32>
    %88 = vector.shape_cast %87 : vector<64xf32> to vector<1x64xf32>
    %89 = vector.broadcast %88 : vector<1x64xf32> to vector<4x64xf32>
    %90 = arith.subf %86, %89 : vector<4x64xf32>
    %91 = math.exp %90 : vector<4x64xf32>
    %cst_54 = arith.constant dense<0.000000e+00> : vector<64xf32>
    %92 = vector.multi_reduction <add>, %91, %cst_54 [0] : vector<4x64xf32> to vector<64xf32>
    %93 = vector.shape_cast %92 : vector<64xf32> to vector<1x64xf32>
    %94 = vector.broadcast %93 : vector<1x64xf32> to vector<4x64xf32>
    %95 = arith.divf %91, %94 : vector<4x64xf32>
    %c0_55 = arith.constant 0 : index
    %c8_56 = arith.constant 8 : index
    %c0_57 = arith.constant 0 : index
    %96 = vector.load %arg4[%c0_55, %c8_56, %c0_57] : memref<1x16x64xf32, #tpu.memory_space<vmem>>, vector<1x4x64xf32>
    %97 = vector.shape_cast %96 : vector<1x4x64xf32> to vector<4x64xf32>
    %98 = vector.shape_cast %95 : vector<4x64xf32> to vector<1x4x64xf32>
    tpu.vector_store %arg4[%c0_55, %c8_56, %c0_57], %98 {strides = array<i32>} : memref<1x16x64xf32, #tpu.memory_space<vmem>>, vector<1x4x64xf32>,
    %c0_58 = arith.constant 0 : index
    %c8_59 = arith.constant 8 : index
    %c0_60 = arith.constant 0 : index
    %99 = vector.load %arg2[%c0_58, %c8_59, %c0_60] : memref<1x16x64xf32, #tpu.memory_space<vmem>>, vector<1x4x64xf32>
    %100 = vector.shape_cast %99 : vector<1x4x64xf32> to vector<4x64xf32>
    %cst_61 = arith.constant dense<0.000000e+00> : vector<4x4xf32>
    %101 = tpu.matmul %95, %100, %cst_61 {dimension_numbers = #tpu.dot_dimension_numbers<[1], [1], [0], [0], [0, 0, 1, 0], [], []>} : vector<4x64xf32>, vector<4x64xf32>, vector<4x4xf32> -> vector<4x4xf32>
    %c0_62 = arith.constant 0 : index
    %c0_63 = arith.constant 0 : index
    %c0_64 = arith.constant 0 : index
    %102 = vector.load %arg3[%c0_62, %c0_63, %c0_64] : memref<1x12x64xf32, #tpu.memory_space<vmem>>, vector<1x4x64xf32>
    %103 = vector.shape_cast %102 : vector<1x4x64xf32> to vector<4x64xf32>
    %104 = arith.mulf %95, %103 : vector<4x64xf32>
    %cst_65 = arith.constant dense<0.000000e+00> : vector<4xf32>
    %105 = vector.multi_reduction <add>, %104, %cst_65 [1] : vector<4x64xf32> to vector<4xf32>
    %106 = vector.shape_cast %105 : vector<4xf32> to vector<4x1xf32>
    %107 = arith.mulf %104, %103 : vector<4x64xf32>
    %cst_66 = arith.constant dense<0.000000e+00> : vector<4xf32>
    %108 = vector.multi_reduction <add>, %107, %cst_66 [1] : vector<4x64xf32> to vector<4xf32>
    %109 = vector.shape_cast %108 : vector<4xf32> to vector<4x1xf32>
    %110 = arith.addf %66, %109 : vector<4x1xf32>
    %c0_67 = arith.constant 0 : index
    %c4_68 = arith.constant 4 : index
    %c0_69 = arith.constant 0 : index
    %111 = vector.load %arg3[%c0_67, %c4_68, %c0_69] : memref<1x12x64xf32, #tpu.memory_space<vmem>>, vector<1x4x64xf32>
    %112 = vector.shape_cast %111 : vector<1x4x64xf32> to vector<4x64xf32>
    %113 = arith.mulf %95, %112 : vector<4x64xf32>
    %cst_70 = arith.constant dense<0.000000e+00> : vector<4xf32>
    %114 = vector.multi_reduction <add>, %113, %cst_70 [1] : vector<4x64xf32> to vector<4xf32>
    %115 = vector.shape_cast %114 : vector<4xf32> to vector<4x1xf32>
    %116 = arith.mulf %113, %112 : vector<4x64xf32>
    %cst_71 = arith.constant dense<0.000000e+00> : vector<4xf32>
    %117 = vector.multi_reduction <add>, %116, %cst_71 [1] : vector<4x64xf32> to vector<4xf32>
    %118 = vector.shape_cast %117 : vector<4xf32> to vector<4x1xf32>
    %119 = arith.addf %75, %118 : vector<4x1xf32>
    %c0_72 = arith.constant 0 : index
    %c8_73 = arith.constant 8 : index
    %c0_74 = arith.constant 0 : index
    %120 = vector.load %arg3[%c0_72, %c8_73, %c0_74] : memref<1x12x64xf32, #tpu.memory_space<vmem>>, vector<1x4x64xf32>
    %121 = vector.shape_cast %120 : vector<1x4x64xf32> to vector<4x64xf32>
    %122 = arith.mulf %95, %121 : vector<4x64xf32>
    %cst_75 = arith.constant dense<0.000000e+00> : vector<4xf32>
    %123 = vector.multi_reduction <add>, %122, %cst_75 [1] : vector<4x64xf32> to vector<4xf32>
    %124 = vector.shape_cast %123 : vector<4xf32> to vector<4x1xf32>
    %125 = arith.mulf %122, %121 : vector<4x64xf32>
    %cst_76 = arith.constant dense<0.000000e+00> : vector<4xf32>
    %126 = vector.multi_reduction <add>, %125, %cst_76 [1] : vector<4x64xf32> to vector<4xf32>
    %127 = vector.shape_cast %126 : vector<4xf32> to vector<4x1xf32>
    %128 = arith.addf %84, %127 : vector<4x1xf32>
    %c0_77 = arith.constant 0 : index
    %c12 = arith.constant 12 : index
    %c0_78 = arith.constant 0 : index
    %129 = vector.load %arg1[%c0_77, %c12, %c0_78] : memref<1x16x64xf32, #tpu.memory_space<vmem>>, vector<1x4x64xf32>
    %130 = vector.shape_cast %129 : vector<1x4x64xf32> to vector<4x64xf32>
    %cst_79 = arith.constant dense<0xFF800000> : vector<64xf32>
    %131 = vector.multi_reduction <maximumf>, %130, %cst_79 [0] : vector<4x64xf32> to vector<64xf32>
    %132 = vector.shape_cast %131 : vector<64xf32> to vector<1x64xf32>
    %133 = vector.broadcast %132 : vector<1x64xf32> to vector<4x64xf32>
    %134 = arith.subf %130, %133 : vector<4x64xf32>
    %135 = math.exp %134 : vector<4x64xf32>
    %cst_80 = arith.constant dense<0.000000e+00> : vector<64xf32>
    %136 = vector.multi_reduction <add>, %135, %cst_80 [0] : vector<4x64xf32> to vector<64xf32>
    %137 = vector.shape_cast %136 : vector<64xf32> to vector<1x64xf32>
    %138 = vector.broadcast %137 : vector<1x64xf32> to vector<4x64xf32>
    %139 = arith.divf %135, %138 : vector<4x64xf32>
    %c0_81 = arith.constant 0 : index
    %c12_82 = arith.constant 12 : index
    %c0_83 = arith.constant 0 : index
    %140 = vector.load %arg4[%c0_81, %c12_82, %c0_83] : memref<1x16x64xf32, #tpu.memory_space<vmem>>, vector<1x4x64xf32>
    %141 = vector.shape_cast %140 : vector<1x4x64xf32> to vector<4x64xf32>
    %142 = vector.shape_cast %139 : vector<4x64xf32> to vector<1x4x64xf32>
    tpu.vector_store %arg4[%c0_81, %c12_82, %c0_83], %142 {strides = array<i32>} : memref<1x16x64xf32, #tpu.memory_space<vmem>>, vector<1x4x64xf32>,
    %c0_84 = arith.constant 0 : index
    %c12_85 = arith.constant 12 : index
    %c0_86 = arith.constant 0 : index
    %143 = vector.load %arg2[%c0_84, %c12_85, %c0_86] : memref<1x16x64xf32, #tpu.memory_space<vmem>>, vector<1x4x64xf32>
    %144 = vector.shape_cast %143 : vector<1x4x64xf32> to vector<4x64xf32>
    %cst_87 = arith.constant dense<0.000000e+00> : vector<4x4xf32>
    %145 = tpu.matmul %139, %144, %cst_87 {dimension_numbers = #tpu.dot_dimension_numbers<[1], [1], [0], [0], [0, 0, 1, 0], [], []>} : vector<4x64xf32>, vector<4x64xf32>, vector<4x4xf32> -> vector<4x4xf32>
    %c0_88 = arith.constant 0 : index
    %c0_89 = arith.constant 0 : index
    %c0_90 = arith.constant 0 : index
    %146 = vector.load %arg3[%c0_88, %c0_89, %c0_90] : memref<1x12x64xf32, #tpu.memory_space<vmem>>, vector<1x4x64xf32>
    %147 = vector.shape_cast %146 : vector<1x4x64xf32> to vector<4x64xf32>
    %148 = arith.mulf %139, %147 : vector<4x64xf32>
    %cst_91 = arith.constant dense<0.000000e+00> : vector<4xf32>
    %149 = vector.multi_reduction <add>, %148, %cst_91 [1] : vector<4x64xf32> to vector<4xf32>
    %150 = vector.shape_cast %149 : vector<4xf32> to vector<4x1xf32>
    %151 = arith.mulf %148, %147 : vector<4x64xf32>
    %cst_92 = arith.constant dense<0.000000e+00> : vector<4xf32>
    %152 = vector.multi_reduction <add>, %151, %cst_92 [1] : vector<4x64xf32> to vector<4xf32>
    %153 = vector.shape_cast %152 : vector<4xf32> to vector<4x1xf32>
    %154 = arith.addf %110, %153 : vector<4x1xf32>
    %c0_93 = arith.constant 0 : index
    %c4_94 = arith.constant 4 : index
    %c0_95 = arith.constant 0 : index
    %155 = vector.load %arg3[%c0_93, %c4_94, %c0_95] : memref<1x12x64xf32, #tpu.memory_space<vmem>>, vector<1x4x64xf32>
    %156 = vector.shape_cast %155 : vector<1x4x64xf32> to vector<4x64xf32>
    %157 = arith.mulf %139, %156 : vector<4x64xf32>
    %cst_96 = arith.constant dense<0.000000e+00> : vector<4xf32>
    %158 = vector.multi_reduction <add>, %157, %cst_96 [1] : vector<4x64xf32> to vector<4xf32>
    %159 = vector.shape_cast %158 : vector<4xf32> to vector<4x1xf32>
    %160 = arith.mulf %157, %156 : vector<4x64xf32>
    %cst_97 = arith.constant dense<0.000000e+00> : vector<4xf32>
    %161 = vector.multi_reduction <add>, %160, %cst_97 [1] : vector<4x64xf32> to vector<4xf32>
    %162 = vector.shape_cast %161 : vector<4xf32> to vector<4x1xf32>
    %163 = arith.addf %119, %162 : vector<4x1xf32>
    %c0_98 = arith.constant 0 : index
    %c8_99 = arith.constant 8 : index
    %c0_100 = arith.constant 0 : index
    %164 = vector.load %arg3[%c0_98, %c8_99, %c0_100] : memref<1x12x64xf32, #tpu.memory_space<vmem>>, vector<1x4x64xf32>
    %165 = vector.shape_cast %164 : vector<1x4x64xf32> to vector<4x64xf32>
    %166 = arith.mulf %139, %165 : vector<4x64xf32>
    %cst_101 = arith.constant dense<0.000000e+00> : vector<4xf32>
    %167 = vector.multi_reduction <add>, %166, %cst_101 [1] : vector<4x64xf32> to vector<4xf32>
    %168 = vector.shape_cast %167 : vector<4xf32> to vector<4x1xf32>
    %169 = arith.mulf %166, %165 : vector<4x64xf32>
    %cst_102 = arith.constant dense<0.000000e+00> : vector<4xf32>
    %170 = vector.multi_reduction <add>, %169, %cst_102 [1] : vector<4x64xf32> to vector<4xf32>
    %171 = vector.shape_cast %170 : vector<4xf32> to vector<4x1xf32>
    %172 = arith.addf %128, %171 : vector<4x1xf32>
    %173 = vector.extract_strided_slice %16 {offsets = [0, 0], sizes = [4, 3], strides = [1, 1]} : vector<4x4xf32> to vector<4x3xf32>
    %cst_103 = arith.constant 0.000000e+00 : f32
    %174 = vector.broadcast %cst_103 : f32 to vector<4x3xf32>
    %175 = arith.addf %174, %173 : vector<4x3xf32>
    %176 = vector.extract_strided_slice %57 {offsets = [0, 0], sizes = [4, 3], strides = [1, 1]} : vector<4x4xf32> to vector<4x3xf32>
    %177 = arith.addf %175, %176 : vector<4x3xf32>
    %178 = vector.extract_strided_slice %101 {offsets = [0, 0], sizes = [4, 3], strides = [1, 1]} : vector<4x4xf32> to vector<4x3xf32>
    %179 = arith.addf %177, %178 : vector<4x3xf32>
    %180 = vector.extract_strided_slice %145 {offsets = [0, 0], sizes = [4, 3], strides = [1, 1]} : vector<4x4xf32> to vector<4x3xf32>
    %181 = arith.addf %179, %180 : vector<4x3xf32>
    %182 = vector.extract_strided_slice %16 {offsets = [0, 3], sizes = [4, 1], strides = [1, 1]} : vector<4x4xf32> to vector<4x1xf32>
    %cst_104 = arith.constant 0.000000e+00 : f32
    %183 = vector.broadcast %cst_104 : f32 to vector<4x1xf32>
    %184 = arith.addf %183, %182 : vector<4x1xf32>
    %185 = vector.extract_strided_slice %57 {offsets = [0, 3], sizes = [4, 1], strides = [1, 1]} : vector<4x4xf32> to vector<4x1xf32>
    %186 = arith.addf %184, %185 : vector<4x1xf32>
    %187 = vector.extract_strided_slice %101 {offsets = [0, 3], sizes = [4, 1], strides = [1, 1]} : vector<4x4xf32> to vector<4x1xf32>
    %188 = arith.addf %186, %187 : vector<4x1xf32>
    %189 = vector.extract_strided_slice %145 {offsets = [0, 3], sizes = [4, 1], strides = [1, 1]} : vector<4x4xf32> to vector<4x1xf32>
    %190 = arith.addf %188, %189 : vector<4x1xf32>
    %cst_105 = arith.constant 1.000000e-07 : f32
    %191 = vector.broadcast %cst_105 : f32 to vector<4x1xf32>
    %192 = arith.addf %190, %191 : vector<4x1xf32>
    %193 = vector.broadcast %192 : vector<4x1xf32> to vector<4x3xf32>
    %194 = arith.divf %181, %193 : vector<4x3xf32>
    %c0_106 = arith.constant 0 : index
    %c0_107 = arith.constant 0 : index
    %c0_108 = arith.constant 0 : index
    %195 = vector.load %arg5[%c0_106, %c0_107, %c0_108] : memref<1x4x3xf32, #tpu.memory_space<vmem>>, vector<1x4x3xf32>
    %196 = vector.shape_cast %195 : vector<1x4x3xf32> to vector<4x3xf32>
    %197 = vector.shape_cast %194 : vector<4x3xf32> to vector<1x4x3xf32>
    tpu.vector_store %arg5[%c0_106, %c0_107, %c0_108], %197 {strides = array<i32>} : memref<1x4x3xf32, #tpu.memory_space<vmem>>, vector<1x4x3xf32>,
    %cst_109 = arith.constant 0.000000e+00 : f32
    %198 = vector.broadcast %cst_109 : f32 to vector<4x1xf32>
    %cst_110 = arith.constant 0.000000e+00 : f32
    %199 = vector.broadcast %cst_110 : f32 to vector<4x1xf32>
    %200 = vector.extract_strided_slice %194 {offsets = [0, 0], sizes = [1, 1], strides = [1, 1]} : vector<4x3xf32> to vector<1x1xf32>
    %201 = vector.broadcast %200 : vector<1x1xf32> to vector<4x1xf32>
    %202 = arith.mulf %201, %21 : vector<4x1xf32>
    %203 = arith.addf %198, %202 : vector<4x1xf32>
    %204 = arith.mulf %200, %200 : vector<1x1xf32>
    %205 = vector.extract_strided_slice %16 {offsets = [0, 3], sizes = [4, 1], strides = [1, 1]} : vector<4x4xf32> to vector<4x1xf32>
    %206 = vector.broadcast %204 : vector<1x1xf32> to vector<4x1xf32>
    %207 = arith.mulf %206, %205 : vector<4x1xf32>
    %208 = arith.addf %199, %207 : vector<4x1xf32>
    %209 = vector.extract_strided_slice %194 {offsets = [1, 0], sizes = [1, 1], strides = [1, 1]} : vector<4x3xf32> to vector<1x1xf32>
    %210 = vector.broadcast %209 : vector<1x1xf32> to vector<4x1xf32>
    %211 = arith.mulf %210, %62 : vector<4x1xf32>
    %212 = arith.addf %203, %211 : vector<4x1xf32>
    %213 = arith.mulf %209, %209 : vector<1x1xf32>
    %214 = vector.extract_strided_slice %57 {offsets = [0, 3], sizes = [4, 1], strides = [1, 1]} : vector<4x4xf32> to vector<4x1xf32>
    %215 = vector.broadcast %213 : vector<1x1xf32> to vector<4x1xf32>
    %216 = arith.mulf %215, %214 : vector<4x1xf32>
    %217 = arith.addf %208, %216 : vector<4x1xf32>
    %218 = vector.extract_strided_slice %194 {offsets = [2, 0], sizes = [1, 1], strides = [1, 1]} : vector<4x3xf32> to vector<1x1xf32>
    %219 = vector.broadcast %218 : vector<1x1xf32> to vector<4x1xf32>
    %220 = arith.mulf %219, %106 : vector<4x1xf32>
    %221 = arith.addf %212, %220 : vector<4x1xf32>
    %222 = arith.mulf %218, %218 : vector<1x1xf32>
    %223 = vector.extract_strided_slice %101 {offsets = [0, 3], sizes = [4, 1], strides = [1, 1]} : vector<4x4xf32> to vector<4x1xf32>
    %224 = vector.broadcast %222 : vector<1x1xf32> to vector<4x1xf32>
    %225 = arith.mulf %224, %223 : vector<4x1xf32>
    %226 = arith.addf %217, %225 : vector<4x1xf32>
    %227 = vector.extract_strided_slice %194 {offsets = [3, 0], sizes = [1, 1], strides = [1, 1]} : vector<4x3xf32> to vector<1x1xf32>
    %228 = vector.broadcast %227 : vector<1x1xf32> to vector<4x1xf32>
    %229 = arith.mulf %228, %150 : vector<4x1xf32>
    %230 = arith.addf %221, %229 : vector<4x1xf32>
    %231 = arith.mulf %227, %227 : vector<1x1xf32>
    %232 = vector.extract_strided_slice %145 {offsets = [0, 3], sizes = [4, 1], strides = [1, 1]} : vector<4x4xf32> to vector<4x1xf32>
    %233 = vector.broadcast %231 : vector<1x1xf32> to vector<4x1xf32>
    %234 = arith.mulf %233, %232 : vector<4x1xf32>
    %235 = arith.addf %226, %234 : vector<4x1xf32>
    %cst_111 = arith.constant 2.000000e+00 : f32
    %236 = vector.broadcast %cst_111 : f32 to vector<4x1xf32>
    %237 = arith.mulf %236, %230 : vector<4x1xf32>
    %238 = arith.subf %154, %237 : vector<4x1xf32>
    %239 = arith.addf %238, %235 : vector<4x1xf32>
    %cst_112 = arith.constant 0.000000e+00 : f32
    %240 = vector.broadcast %cst_112 : f32 to vector<4x1xf32>
    %241 = arith.maximumf %239, %240 : vector<4x1xf32>
    %242 = arith.divf %241, %192 : vector<4x1xf32>
    %243 = math.sqrt %242 : vector<4x1xf32>
    %cst_113 = arith.constant 0.000000e+00 : f32
    %244 = vector.broadcast %cst_113 : f32 to vector<4x1xf32>
    %cst_114 = arith.constant 0.000000e+00 : f32
    %245 = vector.broadcast %cst_114 : f32 to vector<4x1xf32>
    %246 = vector.extract_strided_slice %194 {offsets = [0, 1], sizes = [1, 1], strides = [1, 1]} : vector<4x3xf32> to vector<1x1xf32>
    %247 = vector.broadcast %246 : vector<1x1xf32> to vector<4x1xf32>
    %248 = arith.mulf %247, %29 : vector<4x1xf32>
    %249 = arith.addf %244, %248 : vector<4x1xf32>
    %250 = arith.mulf %246, %246 : vector<1x1xf32>
    %251 = vector.extract_strided_slice %16 {offsets = [0, 3], sizes = [4, 1], strides = [1, 1]} : vector<4x4xf32> to vector<4x1xf32>
    %252 = vector.broadcast %250 : vector<1x1xf32> to vector<4x1xf32>
    %253 = arith.mulf %252, %251 : vector<4x1xf32>
    %254 = arith.addf %245, %253 : vector<4x1xf32>
    %255 = vector.extract_strided_slice %194 {offsets = [1, 1], sizes = [1, 1], strides = [1, 1]} : vector<4x3xf32> to vector<1x1xf32>
    %256 = vector.broadcast %255 : vector<1x1xf32> to vector<4x1xf32>
    %257 = arith.mulf %256, %71 : vector<4x1xf32>
    %258 = arith.addf %249, %257 : vector<4x1xf32>
    %259 = arith.mulf %255, %255 : vector<1x1xf32>
    %260 = vector.extract_strided_slice %57 {offsets = [0, 3], sizes = [4, 1], strides = [1, 1]} : vector<4x4xf32> to vector<4x1xf32>
    %261 = vector.broadcast %259 : vector<1x1xf32> to vector<4x1xf32>
    %262 = arith.mulf %261, %260 : vector<4x1xf32>
    %263 = arith.addf %254, %262 : vector<4x1xf32>
    %264 = vector.extract_strided_slice %194 {offsets = [2, 1], sizes = [1, 1], strides = [1, 1]} : vector<4x3xf32> to vector<1x1xf32>
    %265 = vector.broadcast %264 : vector<1x1xf32> to vector<4x1xf32>
    %266 = arith.mulf %265, %115 : vector<4x1xf32>
    %267 = arith.addf %258, %266 : vector<4x1xf32>
    %268 = arith.mulf %264, %264 : vector<1x1xf32>
    %269 = vector.extract_strided_slice %101 {offsets = [0, 3], sizes = [4, 1], strides = [1, 1]} : vector<4x4xf32> to vector<4x1xf32>
    %270 = vector.broadcast %268 : vector<1x1xf32> to vector<4x1xf32>
    %271 = arith.mulf %270, %269 : vector<4x1xf32>
    %272 = arith.addf %263, %271 : vector<4x1xf32>
    %273 = vector.extract_strided_slice %194 {offsets = [3, 1], sizes = [1, 1], strides = [1, 1]} : vector<4x3xf32> to vector<1x1xf32>
    %274 = vector.broadcast %273 : vector<1x1xf32> to vector<4x1xf32>
    %275 = arith.mulf %274, %159 : vector<4x1xf32>
    %276 = arith.addf %267, %275 : vector<4x1xf32>
    %277 = arith.mulf %273, %273 : vector<1x1xf32>
    %278 = vector.extract_strided_slice %145 {offsets = [0, 3], sizes = [4, 1], strides = [1, 1]} : vector<4x4xf32> to vector<4x1xf32>
    %279 = vector.broadcast %277 : vector<1x1xf32> to vector<4x1xf32>
    %280 = arith.mulf %279, %278 : vector<4x1xf32>
    %281 = arith.addf %272, %280 : vector<4x1xf32>
    %cst_115 = arith.constant 2.000000e+00 : f32
    %282 = vector.broadcast %cst_115 : f32 to vector<4x1xf32>
    %283 = arith.mulf %282, %276 : vector<4x1xf32>
    %284 = arith.subf %163, %283 : vector<4x1xf32>
    %285 = arith.addf %284, %281 : vector<4x1xf32>
    %cst_116 = arith.constant 0.000000e+00 : f32
    %286 = vector.broadcast %cst_116 : f32 to vector<4x1xf32>
    %287 = arith.maximumf %285, %286 : vector<4x1xf32>
    %288 = arith.divf %287, %192 : vector<4x1xf32>
    %289 = math.sqrt %288 : vector<4x1xf32>
    %cst_117 = arith.constant 0.000000e+00 : f32
    %290 = vector.broadcast %cst_117 : f32 to vector<4x1xf32>
    %cst_118 = arith.constant 0.000000e+00 : f32
    %291 = vector.broadcast %cst_118 : f32 to vector<4x1xf32>
    %292 = vector.extract_strided_slice %194 {offsets = [0, 2], sizes = [1, 1], strides = [1, 1]} : vector<4x3xf32> to vector<1x1xf32>
    %293 = vector.broadcast %292 : vector<1x1xf32> to vector<4x1xf32>
    %294 = arith.mulf %293, %37 : vector<4x1xf32>
    %295 = arith.addf %290, %294 : vector<4x1xf32>
    %296 = arith.mulf %292, %292 : vector<1x1xf32>
    %297 = vector.extract_strided_slice %16 {offsets = [0, 3], sizes = [4, 1], strides = [1, 1]} : vector<4x4xf32> to vector<4x1xf32>
    %298 = vector.broadcast %296 : vector<1x1xf32> to vector<4x1xf32>
    %299 = arith.mulf %298, %297 : vector<4x1xf32>
    %300 = arith.addf %291, %299 : vector<4x1xf32>
    %301 = vector.extract_strided_slice %194 {offsets = [1, 2], sizes = [1, 1], strides = [1, 1]} : vector<4x3xf32> to vector<1x1xf32>
    %302 = vector.broadcast %301 : vector<1x1xf32> to vector<4x1xf32>
    %303 = arith.mulf %302, %80 : vector<4x1xf32>
    %304 = arith.addf %295, %303 : vector<4x1xf32>
    %305 = arith.mulf %301, %301 : vector<1x1xf32>
    %306 = vector.extract_strided_slice %57 {offsets = [0, 3], sizes = [4, 1], strides = [1, 1]} : vector<4x4xf32> to vector<4x1xf32>
    %307 = vector.broadcast %305 : vector<1x1xf32> to vector<4x1xf32>
    %308 = arith.mulf %307, %306 : vector<4x1xf32>
    %309 = arith.addf %300, %308 : vector<4x1xf32>
    %310 = vector.extract_strided_slice %194 {offsets = [2, 2], sizes = [1, 1], strides = [1, 1]} : vector<4x3xf32> to vector<1x1xf32>
    %311 = vector.broadcast %310 : vector<1x1xf32> to vector<4x1xf32>
    %312 = arith.mulf %311, %124 : vector<4x1xf32>
    %313 = arith.addf %304, %312 : vector<4x1xf32>
    %314 = arith.mulf %310, %310 : vector<1x1xf32>
    %315 = vector.extract_strided_slice %101 {offsets = [0, 3], sizes = [4, 1], strides = [1, 1]} : vector<4x4xf32> to vector<4x1xf32>
    %316 = vector.broadcast %314 : vector<1x1xf32> to vector<4x1xf32>
    %317 = arith.mulf %316, %315 : vector<4x1xf32>
    %318 = arith.addf %309, %317 : vector<4x1xf32>
    %319 = vector.extract_strided_slice %194 {offsets = [3, 2], sizes = [1, 1], strides = [1, 1]} : vector<4x3xf32> to vector<1x1xf32>
    %320 = vector.broadcast %319 : vector<1x1xf32> to vector<4x1xf32>
    %321 = arith.mulf %320, %168 : vector<4x1xf32>
    %322 = arith.addf %313, %321 : vector<4x1xf32>
    %323 = arith.mulf %319, %319 : vector<1x1xf32>
    %324 = vector.extract_strided_slice %145 {offsets = [0, 3], sizes = [4, 1], strides = [1, 1]} : vector<4x4xf32> to vector<4x1xf32>
    %325 = vector.broadcast %323 : vector<1x1xf32> to vector<4x1xf32>
    %326 = arith.mulf %325, %324 : vector<4x1xf32>
    %327 = arith.addf %318, %326 : vector<4x1xf32>
    %cst_119 = arith.constant 2.000000e+00 : f32
    %328 = vector.broadcast %cst_119 : f32 to vector<4x1xf32>
    %329 = arith.mulf %328, %322 : vector<4x1xf32>
    %330 = arith.subf %172, %329 : vector<4x1xf32>
    %331 = arith.addf %330, %327 : vector<4x1xf32>
    %cst_120 = arith.constant 0.000000e+00 : f32
    %332 = vector.broadcast %cst_120 : f32 to vector<4x1xf32>
    %333 = arith.maximumf %331, %332 : vector<4x1xf32>
    %334 = arith.divf %333, %192 : vector<4x1xf32>
    %335 = math.sqrt %334 : vector<4x1xf32>
    %336 = tpu.concatenate %243, %289, %335 in 1 : vector<4x1xf32>, vector<4x1xf32>, vector<4x1xf32> -> vector<4x3xf32>
    %c0_121 = arith.constant 0 : index
    %c0_122 = arith.constant 0 : index
    %c0_123 = arith.constant 0 : index
    %337 = vector.load %arg6[%c0_121, %c0_122, %c0_123] : memref<1x4x3xf32, #tpu.memory_space<vmem>>, vector<1x4x3xf32>
    %338 = vector.shape_cast %337 : vector<1x4x3xf32> to vector<4x3xf32>
    %339 = vector.shape_cast %336 : vector<4x3xf32> to vector<1x4x3xf32>
    tpu.vector_store %arg6[%c0_121, %c0_122, %c0_123], %339 {strides = array<i32>} : memref<1x4x3xf32, #tpu.memory_space<vmem>>, vector<1x4x3xf32>,
    return
  }
  func.func @transform_0(%arg0: i32) -> (i32, i32, i32) {
    %c0_i32 = arith.constant 0 : i32
    %c0_i32_0 = arith.constant 0 : i32
    %c0_i32_1 = arith.constant 0 : i32
    return %arg0, %c0_i32, %c0_i32_0 : i32, i32, i32
  }
  func.func @transform_1(%arg0: i32) -> (i32, i32, i32) {
    %c0_i32 = arith.constant 0 : i32
    %c0_i32_0 = arith.constant 0 : i32
    %c0_i32_1 = arith.constant 0 : i32
    return %arg0, %c0_i32, %c0_i32_0 : i32, i32, i32
  }
  func.func @transform_2(%arg0: i32) -> (i32, i32, i32) {
    %c0_i32 = arith.constant 0 : i32
    %c0_i32_0 = arith.constant 0 : i32
    %c0_i32_1 = arith.constant 0 : i32
    return %arg0, %c0_i32, %c0_i32_0 : i32, i32, i32
  }
  func.func @transform_3(%arg0: i32) -> (i32, i32, i32) {
    %c0_i32 = arith.constant 0 : i32
    %c0_i32_0 = arith.constant 0 : i32
    %c0_i32_1 = arith.constant 0 : i32
    return %arg0, %c0_i32, %c0_i32_0 : i32, i32, i32
  }
  func.func @transform_4(%arg0: i32) -> (i32, i32, i32) {
    %c0_i32 = arith.constant 0 : i32
    %c0_i32_0 = arith.constant 0 : i32
    %c0_i32_1 = arith.constant 0 : i32
    return %arg0, %c0_i32, %c0_i32_0 : i32, i32, i32
  }
  func.func @transform_5(%arg0: i32) -> (i32, i32, i32) {
    %c0_i32 = arith.constant 0 : i32
    %c0_i32_0 = arith.constant 0 : i32
    %c0_i32_1 = arith.constant 0 : i32
    return %arg0, %c0_i32, %c0_i32_0 : i32, i32, i32
  }
}

module attributes {stable_mosaic.version = 11 : i64} {
  func.func @_logprob_kernel(%arg0: i32, %arg1: memref<1x16x64xf32, #tpu.memory_space<vmem>>, %arg2: memref<1x16x64xf32, #tpu.memory_space<vmem>>, %arg3: memref<1x4x7xf32, #tpu.memory_space<vmem>>, %arg4: memref<1x1x1xf32, #tpu.memory_space<vmem>>) attributes {dimension_semantics = [#tpu.dimension_semantics<parallel>], iteration_bounds = array<i64: 2>, scalar_prefetch = 0 : i64, scratch_operands = 0 : i64, tpu.core_type = #tpu.core_type<tc>, window_params = [{transform_indices = @transform_0, window_bounds = array<i64: 1, 16, 64>}, {transform_indices = @transform_1, window_bounds = array<i64: 1, 16, 64>}, {transform_indices = @transform_2, window_bounds = array<i64: 1, 4, 7>}, {transform_indices = @transform_3, window_bounds = array<i64: 1, 1, 1>}]} {
    %c0 = arith.constant 0 : index
    %c0_0 = arith.constant 0 : index
    %c0_1 = arith.constant 0 : index
    %0 = vector.load %arg3[%c0, %c0_0, %c0_1] : memref<1x4x7xf32, #tpu.memory_space<vmem>>, vector<1x4x7xf32>
    %1 = vector.shape_cast %0 : vector<1x4x7xf32> to vector<4x7xf32>
    %2 = vector.extract_strided_slice %1 {offsets = [0, 0], sizes = [4, 6], strides = [1, 1]} : vector<4x7xf32> to vector<4x6xf32>
    %3 = vector.extract_strided_slice %1 {offsets = [0, 6], sizes = [4, 1], strides = [1, 1]} : vector<4x7xf32> to vector<4x1xf32>
    %cst = arith.constant 0.000000e+00 : f32
    %4 = vector.broadcast %cst : f32 to vector<1x1xf32>
    %c0_2 = arith.constant 0 : index
    %c0_3 = arith.constant 0 : index
    %c0_4 = arith.constant 0 : index
    %5 = vector.load %arg2[%c0_2, %c0_3, %c0_4] : memref<1x16x64xf32, #tpu.memory_space<vmem>>, vector<1x3x64xf32>
    %6 = vector.shape_cast %5 : vector<1x3x64xf32> to vector<3x64xf32>
    %c0_5 = arith.constant 0 : index
    %c0_6 = arith.constant 0 : index
    %c0_7 = arith.constant 0 : index
    %7 = vector.load %arg1[%c0_5, %c0_6, %c0_7] : memref<1x16x64xf32, #tpu.memory_space<vmem>>, vector<1x4x64xf32>
    %8 = vector.shape_cast %7 : vector<1x4x64xf32> to vector<4x64xf32>
    %9 = arith.mulf %6, %6 : vector<3x64xf32>
    %10 = tpu.concatenate %9, %6 in 0 : vector<3x64xf32>, vector<3x64xf32> -> vector<6x64xf32>
    %cst_8 = arith.constant dense<0.000000e+00> : vector<4x64xf32>
    %11 = tpu.matmul %2, %10, %cst_8 {dimension_numbers = #tpu.dot_dimension_numbers<[1], [0], [0], [1], [0, 0, 1, 1], [], []>} : vector<4x6xf32>, vector<6x64xf32>, vector<4x64xf32> -> vector<4x64xf32>
    %12 = vector.broadcast %3 : vector<4x1xf32> to vector<4x64xf32>
    %13 = arith.addf %11, %12 : vector<4x64xf32>
    %14 = math.exp %13 : vector<4x64xf32>
    %15 = arith.mulf %14, %8 : vector<4x64xf32>
    %cst_9 = arith.constant dense<0.000000e+00> : vector<64xf32>
    %16 = vector.multi_reduction <add>, %15, %cst_9 [0] : vector<4x64xf32> to vector<64xf32>
    %17 = vector.shape_cast %16 : vector<64xf32> to vector<1x64xf32>
    %cst_10 = arith.constant 1.000000e-07 : f32
    %18 = vector.broadcast %cst_10 : f32 to vector<1x64xf32>
    %19 = arith.addf %17, %18 : vector<1x64xf32>
    %cst_11 = arith.constant 1.000000e+00 : f32
    %20 = vector.broadcast %cst_11 : f32 to vector<1x64xf32>
    %21 = arith.minimumf %19, %20 : vector<1x64xf32>
    %22 = math.log %21 : vector<1x64xf32>
    %cst_12 = arith.constant dense<0.000000e+00> : vector<1xf32>
    %23 = vector.multi_reduction <add>, %22, %cst_12 [1] : vector<1x64xf32> to vector<1xf32>
    %24 = vector.shape_cast %23 : vector<1xf32> to vector<1x1xf32>
    %25 = arith.addf %4, %24 : vector<1x1xf32>
    %c0_13 = arith.constant 0 : index
    %c4 = arith.constant 4 : index
    %c0_14 = arith.constant 0 : index
    %26 = vector.load %arg2[%c0_13, %c4, %c0_14] : memref<1x16x64xf32, #tpu.memory_space<vmem>>, vector<1x3x64xf32>
    %27 = vector.shape_cast %26 : vector<1x3x64xf32> to vector<3x64xf32>
    %c0_15 = arith.constant 0 : index
    %c4_16 = arith.constant 4 : index
    %c0_17 = arith.constant 0 : index
    %28 = vector.load %arg1[%c0_15, %c4_16, %c0_17] : memref<1x16x64xf32, #tpu.memory_space<vmem>>, vector<1x4x64xf32>
    %29 = vector.shape_cast %28 : vector<1x4x64xf32> to vector<4x64xf32>
    %30 = arith.mulf %27, %27 : vector<3x64xf32>
    %31 = tpu.concatenate %30, %27 in 0 : vector<3x64xf32>, vector<3x64xf32> -> vector<6x64xf32>
    %cst_18 = arith.constant dense<0.000000e+00> : vector<4x64xf32>
    %32 = tpu.matmul %2, %31, %cst_18 {dimension_numbers = #tpu.dot_dimension_numbers<[1], [0], [0], [1], [0, 0, 1, 1], [], []>} : vector<4x6xf32>, vector<6x64xf32>, vector<4x64xf32> -> vector<4x64xf32>
    %33 = vector.broadcast %3 : vector<4x1xf32> to vector<4x64xf32>
    %34 = arith.addf %32, %33 : vector<4x64xf32>
    %35 = math.exp %34 : vector<4x64xf32>
    %36 = arith.mulf %35, %29 : vector<4x64xf32>
    %cst_19 = arith.constant dense<0.000000e+00> : vector<64xf32>
    %37 = vector.multi_reduction <add>, %36, %cst_19 [0] : vector<4x64xf32> to vector<64xf32>
    %38 = vector.shape_cast %37 : vector<64xf32> to vector<1x64xf32>
    %cst_20 = arith.constant 1.000000e-07 : f32
    %39 = vector.broadcast %cst_20 : f32 to vector<1x64xf32>
    %40 = arith.addf %38, %39 : vector<1x64xf32>
    %cst_21 = arith.constant 1.000000e+00 : f32
    %41 = vector.broadcast %cst_21 : f32 to vector<1x64xf32>
    %42 = arith.minimumf %40, %41 : vector<1x64xf32>
    %43 = math.log %42 : vector<1x64xf32>
    %cst_22 = arith.constant dense<0.000000e+00> : vector<1xf32>
    %44 = vector.multi_reduction <add>, %43, %cst_22 [1] : vector<1x64xf32> to vector<1xf32>
    %45 = vector.shape_cast %44 : vector<1xf32> to vector<1x1xf32>
    %46 = arith.addf %25, %45 : vector<1x1xf32>
    %c0_23 = arith.constant 0 : index
    %c8 = arith.constant 8 : index
    %c0_24 = arith.constant 0 : index
    %47 = vector.load %arg2[%c0_23, %c8, %c0_24] : memref<1x16x64xf32, #tpu.memory_space<vmem>>, vector<1x3x64xf32>
    %48 = vector.shape_cast %47 : vector<1x3x64xf32> to vector<3x64xf32>
    %c0_25 = arith.constant 0 : index
    %c8_26 = arith.constant 8 : index
    %c0_27 = arith.constant 0 : index
    %49 = vector.load %arg1[%c0_25, %c8_26, %c0_27] : memref<1x16x64xf32, #tpu.memory_space<vmem>>, vector<1x4x64xf32>
    %50 = vector.shape_cast %49 : vector<1x4x64xf32> to vector<4x64xf32>
    %51 = arith.mulf %48, %48 : vector<3x64xf32>
    %52 = tpu.concatenate %51, %48 in 0 : vector<3x64xf32>, vector<3x64xf32> -> vector<6x64xf32>
    %cst_28 = arith.constant dense<0.000000e+00> : vector<4x64xf32>
    %53 = tpu.matmul %2, %52, %cst_28 {dimension_numbers = #tpu.dot_dimension_numbers<[1], [0], [0], [1], [0, 0, 1, 1], [], []>} : vector<4x6xf32>, vector<6x64xf32>, vector<4x64xf32> -> vector<4x64xf32>
    %54 = vector.broadcast %3 : vector<4x1xf32> to vector<4x64xf32>
    %55 = arith.addf %53, %54 : vector<4x64xf32>
    %56 = math.exp %55 : vector<4x64xf32>
    %57 = arith.mulf %56, %50 : vector<4x64xf32>
    %cst_29 = arith.constant dense<0.000000e+00> : vector<64xf32>
    %58 = vector.multi_reduction <add>, %57, %cst_29 [0] : vector<4x64xf32> to vector<64xf32>
    %59 = vector.shape_cast %58 : vector<64xf32> to vector<1x64xf32>
    %cst_30 = arith.constant 1.000000e-07 : f32
    %60 = vector.broadcast %cst_30 : f32 to vector<1x64xf32>
    %61 = arith.addf %59, %60 : vector<1x64xf32>
    %cst_31 = arith.constant 1.000000e+00 : f32
    %62 = vector.broadcast %cst_31 : f32 to vector<1x64xf32>
    %63 = arith.minimumf %61, %62 : vector<1x64xf32>
    %64 = math.log %63 : vector<1x64xf32>
    %cst_32 = arith.constant dense<0.000000e+00> : vector<1xf32>
    %65 = vector.multi_reduction <add>, %64, %cst_32 [1] : vector<1x64xf32> to vector<1xf32>
    %66 = vector.shape_cast %65 : vector<1xf32> to vector<1x1xf32>
    %67 = arith.addf %46, %66 : vector<1x1xf32>
    %c0_33 = arith.constant 0 : index
    %c12 = arith.constant 12 : index
    %c0_34 = arith.constant 0 : index
    %68 = vector.load %arg2[%c0_33, %c12, %c0_34] : memref<1x16x64xf32, #tpu.memory_space<vmem>>, vector<1x3x64xf32>
    %69 = vector.shape_cast %68 : vector<1x3x64xf32> to vector<3x64xf32>
    %c0_35 = arith.constant 0 : index
    %c12_36 = arith.constant 12 : index
    %c0_37 = arith.constant 0 : index
    %70 = vector.load %arg1[%c0_35, %c12_36, %c0_37] : memref<1x16x64xf32, #tpu.memory_space<vmem>>, vector<1x4x64xf32>
    %71 = vector.shape_cast %70 : vector<1x4x64xf32> to vector<4x64xf32>
    %72 = arith.mulf %69, %69 : vector<3x64xf32>
    %73 = tpu.concatenate %72, %69 in 0 : vector<3x64xf32>, vector<3x64xf32> -> vector<6x64xf32>
    %cst_38 = arith.constant dense<0.000000e+00> : vector<4x64xf32>
    %74 = tpu.matmul %2, %73, %cst_38 {dimension_numbers = #tpu.dot_dimension_numbers<[1], [0], [0], [1], [0, 0, 1, 1], [], []>} : vector<4x6xf32>, vector<6x64xf32>, vector<4x64xf32> -> vector<4x64xf32>
    %75 = vector.broadcast %3 : vector<4x1xf32> to vector<4x64xf32>
    %76 = arith.addf %74, %75 : vector<4x64xf32>
    %77 = math.exp %76 : vector<4x64xf32>
    %78 = arith.mulf %77, %71 : vector<4x64xf32>
    %cst_39 = arith.constant dense<0.000000e+00> : vector<64xf32>
    %79 = vector.multi_reduction <add>, %78, %cst_39 [0] : vector<4x64xf32> to vector<64xf32>
    %80 = vector.shape_cast %79 : vector<64xf32> to vector<1x64xf32>
    %cst_40 = arith.constant 1.000000e-07 : f32
    %81 = vector.broadcast %cst_40 : f32 to vector<1x64xf32>
    %82 = arith.addf %80, %81 : vector<1x64xf32>
    %cst_41 = arith.constant 1.000000e+00 : f32
    %83 = vector.broadcast %cst_41 : f32 to vector<1x64xf32>
    %84 = arith.minimumf %82, %83 : vector<1x64xf32>
    %85 = math.log %84 : vector<1x64xf32>
    %cst_42 = arith.constant dense<0.000000e+00> : vector<1xf32>
    %86 = vector.multi_reduction <add>, %85, %cst_42 [1] : vector<1x64xf32> to vector<1xf32>
    %87 = vector.shape_cast %86 : vector<1xf32> to vector<1x1xf32>
    %88 = arith.addf %67, %87 : vector<1x1xf32>
    %c0_43 = arith.constant 0 : index
    %c0_44 = arith.constant 0 : index
    %c0_45 = arith.constant 0 : index
    %89 = vector.load %arg4[%c0_43, %c0_44, %c0_45] : memref<1x1x1xf32, #tpu.memory_space<vmem>>, vector<1x1x1xf32>
    %90 = vector.shape_cast %89 : vector<1x1x1xf32> to vector<1x1xf32>
    %91 = vector.shape_cast %88 : vector<1x1xf32> to vector<1x1x1xf32>
    tpu.vector_store %arg4[%c0_43, %c0_44, %c0_45], %91 {strides = array<i32>} : memref<1x1x1xf32, #tpu.memory_space<vmem>>, vector<1x1x1xf32>,
    return
  }
  func.func @transform_0(%arg0: i32) -> (i32, i32, i32) {
    %c0_i32 = arith.constant 0 : i32
    %c0_i32_0 = arith.constant 0 : i32
    %c0_i32_1 = arith.constant 0 : i32
    return %arg0, %c0_i32, %c0_i32_0 : i32, i32, i32
  }
  func.func @transform_1(%arg0: i32) -> (i32, i32, i32) {
    %c0_i32 = arith.constant 0 : i32
    %c0_i32_0 = arith.constant 0 : i32
    %c0_i32_1 = arith.constant 0 : i32
    return %arg0, %c0_i32, %c0_i32_0 : i32, i32, i32
  }
  func.func @transform_2(%arg0: i32) -> (i32, i32, i32) {
    %c0_i32 = arith.constant 0 : i32
    %c0_i32_0 = arith.constant 0 : i32
    %c0_i32_1 = arith.constant 0 : i32
    return %arg0, %c0_i32, %c0_i32_0 : i32, i32, i32
  }
  func.func @transform_3(%arg0: i32) -> (i32, i32, i32) {
    %c0_i32 = arith.constant 0 : i32
    %c0_i32_0 = arith.constant 0 : i32
    %c0_i32_1 = arith.constant 0 : i32
    return %arg0, %c0_i32, %c0_i32_0 : i32, i32, i32
  }
}

</mosaic_0001>

<llo_original>
// kernel: gmm_forward.3
$region0: #{gmm_forward.3}
  #allocation0 [shape = 'u32[]', space=smem, size = 0x4, offset = 0x4, fixed_abs, tag = 'smem constant byte address 0x4 - core index']
  #allocation1 [shape = 'u32[144,128]{1,0:T(1,128)}', space=vmem, size = 0x12000, scoped, tag = 'internal scratch']
  %s0 = inlined_call_operand.vmem [shape: f32[2,16,64], index: 0, kind: input, shape index: {}]
  %s1 = inlined_call_operand.vmem [shape: f32[2,16,64], index: 1, kind: input, shape index: {}]
  %s2 = inlined_call_operand.vmem [shape: f32[2,4,7], index: 2, kind: input, shape index: {}]
  %s3 = inlined_call_operand.vmem [shape: f32[2,1,1], index: 3, kind: output, shape index: {}]
  %s4 = sld [smem:[#allocation0]]
  $region45: #{gmm_forward.3} parent=0
    _
  %s6 = ssub.s32 1, %s4
  %s7 = scalar_select 0, %s6, %s4
  loop: start=0, step=1, limit=4
  $region2: #{gmm_forward.3} parent=0 // loop_pre_header
    _
  $region3: #{gmm_forward.3} parent=0 // loop_header
    %s9 = sphi 0, %s13
    %p10 = scmp.ge.s32.totalorder %s9, 4
    %s19 = sphi 0, %s21
    %s22 = sphi 0, %s19
    %s23 = sphi 0, %s22
    %s39 = sphi 0, %s23
    %s45 = sphi 0, %s47
    %s48 = sphi 0, %s45
    %s49 = sphi 0, %s48
    %s65 = sphi 0, %s49
    %s71 = sphi 0, %s73
    %s74 = sphi 0, %s71
    %s75 = sphi 0, %s74
    %s91 = sphi 0, %s75
    %s97 = sphi 0, %s99
    %s100 = sphi 0, %s97
    %s101 = sphi 0, %s100
    %s117 = sphi 0, %s101
  $region4: #{gmm_forward.3} parent=0 // loop_header_branch
    %12 = sbr.rel (%p10) target = $region8
  $region5: #{gmm_forward.3} parent=0 // loop_body
    %s14 = ssub.s32 %s9, 1
    %s15 = ssub.s32 %s9, 2
    %s16 = sadd.s32 %s9, 1
    %s17 = ssub.s32 %s9, %s16
    %p18 = scmp.eq.s32.totalorder %s17, 0
    %s20 = sadd.s32 %s19, 1
    %s21 = scalar_select %p18, %s19, %s20
    %p24 = pneg %p18
    %p25 = scmp.eq.s32.totalorder %s9, 1
    %p26 = por %p24, %p25
    %p27 = scmp.ne.s32.totalorder %s19, %s22
    %p28 = scmp.eq.s32.totalorder %s9, 0
    %p29 = por %p27, %p28
    %p30 = scmp.ne.s32.totalorder %s19, %s22
    %p31 = scmp.eq.s32.totalorder %s14, 1
    %p32 = por %p30, %p31
    %p33 = scmp.ne.s32.totalorder %s22, %s23
    %p34 = scmp.eq.s32.totalorder %s14, 0
    %p35 = por %p33, %p34
    %p36 = scmp.ne.s32.totalorder %s22, %s23
    %p37 = scmp.eq.s32.totalorder %s15, 1
    %p38 = por %p36, %p37
    %p40 = scmp.ne.s32.totalorder %s23, %s39
    %p41 = scmp.eq.s32.totalorder %s15, 0
    %p42 = por %p40, %p41
    %s43 = ssub.s32 %s9, %s16
    %p44 = scmp.eq.s32.totalorder %s43, 0
    %s46 = sadd.s32 %s45, 1
    %s47 = scalar_select %p44, %s45, %s46
    %p50 = pneg %p44
    %p51 = scmp.eq.s32.totalorder %s9, 1
    %p52 = por %p50, %p51
    %p53 = scmp.ne.s32.totalorder %s45, %s48
    %p54 = scmp.eq.s32.totalorder %s9, 0
    %p55 = por %p53, %p54
    %p56 = scmp.ne.s32.totalorder %s45, %s48
    %p57 = scmp.eq.s32.totalorder %s14, 1
    %p58 = por %p56, %p57
    %p59 = scmp.ne.s32.totalorder %s48, %s49
    %p60 = scmp.eq.s32.totalorder %s14, 0
    %p61 = por %p59, %p60
    %p62 = scmp.ne.s32.totalorder %s48, %s49
    %p63 = scmp.eq.s32.totalorder %s15, 1
    %p64 = por %p62, %p63
    %p66 = scmp.ne.s32.totalorder %s49, %s65
    %p67 = scmp.eq.s32.totalorder %s15, 0
    %p68 = por %p66, %p67
    %s69 = ssub.s32 %s9, %s16
    %p70 = scmp.eq.s32.totalorder %s69, 0
    %s72 = sadd.s32 %s71, 1
    %s73 = scalar_select %p70, %s71, %s72
    %p76 = pneg %p70
    %p77 = scmp.eq.s32.totalorder %s9, 1
    %p78 = por %p76, %p77
    %p79 = scmp.ne.s32.totalorder %s71, %s74
    %p80 = scmp.eq.s32.totalorder %s9, 0
    %p81 = por %p79, %p80
    %p82 = scmp.ne.s32.totalorder %s71, %s74
    %p83 = scmp.eq.s32.totalorder %s14, 1
    %p84 = por %p82, %p83
    %p85 = scmp.ne.s32.totalorder %s74, %s75
    %p86 = scmp.eq.s32.totalorder %s14, 0
    %p87 = por %p85, %p86
    %p88 = scmp.ne.s32.totalorder %s74, %s75
    %p89 = scmp.eq.s32.totalorder %s15, 1
    %p90 = por %p88, %p89
    %p92 = scmp.ne.s32.totalorder %s75, %s91
    %p93 = scmp.eq.s32.totalorder %s15, 0
    %p94 = por %p92, %p93
    %s95 = ssub.s32 %s9, %s16
    %p96 = scmp.eq.s32.totalorder %s95, 0
    %s98 = sadd.s32 %s97, 1
    %s99 = scalar_select %p96, %s97, %s98
    %p102 = pneg %p96
    %p103 = scmp.eq.s32.totalorder %s9, 1
    %p104 = por %p102, %p103
    %p105 = scmp.ne.s32.totalorder %s97, %s100
    %p106 = scmp.eq.s32.totalorder %s9, 0
    %p107 = por %p105, %p106
    %p108 = scmp.ne.s32.totalorder %s97, %s100
    %p109 = scmp.eq.s32.totalorder %s14, 1
    %p110 = por %p108, %p109
    %p111 = scmp.ne.s32.totalorder %s100, %s101
    %p112 = scmp.eq.s32.totalorder %s14, 0
    %p113 = por %p111, %p112
    %p114 = scmp.ne.s32.totalorder %s100, %s101
    %p115 = scmp.eq.s32.totalorder %s15, 1
    %p116 = por %p114, %p115
    %p118 = scmp.ne.s32.totalorder %s101, %s117
    %p119 = scmp.eq.s32.totalorder %s15, 0
    %p120 = por %p118, %p119
    %p121 = scmp.le.s32.totalorder 1, %s9
    %p122 = scmp.lt.s32.totalorder %s9, 3
    %p123 = pnand %p121, %p122
    %p124 = pneg %p123
    // Predicated region
    $region9: #{gmm_forward.3} parent=5 // pred_check
      _
    $region10: #{gmm_forward.3} parent=5 // pred_check_branch
      %126 = sbr.rel (%p123) target = $region12
    $region11: #{gmm_forward.3} parent=5 // pred_region
      %s127 = ssub.s32 %s9, 1
    $region12: #{gmm_forward.3} parent=5 // pred_fallthru
      _
    %p128 = scmp.lt.s32.totalorder %s9, 2
    // Predicated region
    $region13: #{gmm_forward.3} parent=5 // pred_check
      %p129 = pneg %p128
    $region14: #{gmm_forward.3} parent=5 // pred_check_branch
      %131 = sbr.rel (%p129) target = $region16
    $region15: #{gmm_forward.3} parent=5 // pred_region
      // Predicated region
      $region17: #{gmm_forward.3} parent=15 // pred_check
        %p132 = pneg %p29
      $region18: #{gmm_forward.3} parent=15 // pred_check_branch
        %134 = sbr.rel (%p132) target = $region20
      $region19: #{gmm_forward.3} parent=15 // pred_region
        %p135 = scmp.lt.s32.totalorder %s9, 1
        %s136 = scalar_select %p135, %s9, 1
        %s137 = smul.addr %s136, 2
        %s138 = smul.addr %s137, 8
        %s139 = scalar_lea.vmem %s0, %s138
      $region20: #{gmm_forward.3} parent=15 // pred_fallthru
        _
      // Predicated region
      $region21: #{gmm_forward.3} parent=15 // pred_check
        %p140 = pneg %p55
      $region22: #{gmm_forward.3} parent=15 // pred_check_branch
        %142 = sbr.rel (%p140) target = $region24
      $region23: #{gmm_forward.3} parent=15 // pred_region
        %p143 = scmp.lt.s32.totalorder %s9, 1
        %s144 = scalar_select %p143, %s9, 1
        %s145 = smul.addr %s144, 2
        %s146 = smul.addr %s145, 8
        %s147 = scalar_lea.vmem %s1, %s146
      $region24: #{gmm_forward.3} parent=15 // pred_fallthru
        _
      // Predicated region
      $region25: #{gmm_forward.3} parent=15 // pred_check
        %p148 = pneg %p81
      $region26: #{gmm_forward.3} parent=15 // pred_check_branch
        %150 = sbr.rel (%p148) target = $region28
      $region27: #{gmm_forward.3} parent=15 // pred_region
        %p151 = scmp.lt.s32.totalorder %s9, 1
        %s152 = scalar_select %p151, %s9, 1
        %s153 = smul.addr %s152, 4
        %s154 = scalar_lea.vmem %s2, %s153
      $region28: #{gmm_forward.3} parent=15 // pred_fallthru
        _
    $region16: #{gmm_forward.3} parent=5 // pred_fallthru
      _
    %p155 = scmp.le.s32.totalorder 1, %s9
    %p156 = scmp.lt.s32.totalorder %s9, 3
    %p157 = pnand %p155, %p156
    %p158 = pneg %p157
    // Predicated region
    $region29: #{gmm_forward.3} parent=5 // pred_check
      _
    $region30: #{gmm_forward.3} parent=5 // pred_check_branch
      %160 = sbr.rel (%p157) target = $region32
    $region31: #{gmm_forward.3} parent=5 // pred_region
      %s161 = ssub.s32 %s9, 1
      %p162 = scmp.lt.s32.totalorder %s14, 1
      %s163 = scalar_select %p162, %s14, 1
      %s164 = smul.addr %s163, 2
      %s165 = smul.addr %s164, 8
      %s166 = scalar_lea.vmem %s0, %s165
      %p167 = pneg %p35
      %p168 = pneg %p32
      %p169 = scmp.lt.s32.totalorder %s14, 1
      %s170 = scalar_select %p169, %s14, 1
      %s171 = smul.addr %s170, 2
      %s172 = smul.addr %s171, 8
      %s173 = scalar_lea.vmem %s1, %s172
      %p174 = pneg %p61
      %p175 = pneg %p58
      %p176 = scmp.lt.s32.totalorder %s14, 1
      %s177 = scalar_select %p176, %s14, 1
      %s178 = smul.addr %s177, 4
      %s179 = scalar_lea.vmem %s2, %s178
      %p180 = pneg %p87
      %p181 = pneg %p84
      %p182 = pneg %p113
      %p183 = pneg %p110
      %p184 = scmp.lt.s32.totalorder %s14, 1
      %s185 = scalar_select %p184, %s14, 1
      %s186 = scalar_lea.vmem %s3, %s185
      %p187 = scmp.lt.s32.totalorder %s14, 1
      %s188 = scalar_select %p187, %s14, 1
      %s189 = smul.addr %s188, 2
      %s190 = smul.addr %s189, 8
      %s191 = scalar_lea.vmem %s0, %s190
      %p192 = scmp.lt.s32.totalorder %s14, 1
      %s193 = scalar_select %p192, %s14, 1
      %s194 = smul.addr %s193, 2
      %s195 = smul.addr %s194, 8
      %s196 = scalar_lea.vmem %s1, %s195
      %p197 = scmp.lt.s32.totalorder %s14, 1
      %s198 = scalar_select %p197, %s14, 1
      %s199 = smul.addr %s198, 4
      %s200 = scalar_lea.vmem %s2, %s199
      %p201 = scmp.lt.s32.totalorder %s14, 1
      %s202 = scalar_select %p201, %s14, 1
      %s203 = scalar_lea.vmem %s3, %s202
      %v204 = vld [vmem:[%s200] sm:$0xf]
      %v205 = vld [vmem:[%s196] sm:$0x7]
      %v206 = vld [vmem:[%s191] sm:$0xf]
      %v207 = vmul.f32 %v205, %v205
      %v209 = vrot.slane %v205, 5
      %vm211 = vcmask 1042432
      %v212 = vsel %vm211, %v207, %v209
      %214 = vset.pattern.permute.xlu0 6
      %215 = vperm.xlu0 %214, %v204
      %v216 = vpop.permute.xlu0 %215
      %vm218 = vcmask 48128
      %v219 = vsel %vm218, %v204, 0
      %vm221 = vcmask 1045504
      %v223 = vsel %vm221, %v212, 0
      %225 = vmatprep.subr.mxu0 0.0
      %226 = vmatpush1.msra.mxu0 0.0
      %227 = vmatprep.subr.mxu0 0.0
      %228 = vmatpush1.msra.mxu0 0.0
      %229 = vmatprep.subr.mxu0 0.0
      %230 = vmatpush1.msra.mxu0 0.0
      %231 = vmatprep.subr.mxu0 0.0
      %232 = vmatpush1.msra.mxu0 0.0
      %233 = vmatprep.subr.mxu0 0.0
      %234 = vmatpush1.msra.mxu0 0.0
      %235 = vmatprep.subr.mxu0 0.0
      %236 = vmatpush1.msra.mxu0 0.0
      %237 = vmatprep.subr.mxu0 0.0
      %238 = vmatpush1.msra.mxu0 0.0
      %239 = vmatprep.subr.mxu0 0.0
      %240 = vmatpush1.msra.mxu0 0.0
      %241 = vmatprep.subr.mxu0 0.0
      %242 = vmatpush1.msra.mxu0 0.0
      %243 = vmatprep.subr.mxu0 0.0
      %244 = vmatpush1.msra.mxu0 0.0
      %245 = vmatprep.subr.mxu0 0.0
      %246 = vmatpush1.msra.mxu0 0.0
      %247 = vmatprep.subr.mxu0 0.0
      %248 = vmatpush1.msra.mxu0 0.0
      %249 = vmatprep.subr.mxu0 0.0
      %250 = vmatpush1.msra.mxu0 0.0
      %251 = vmatprep.subr.mxu0 0.0
      %252 = vmatpush1.msra.mxu0 0.0
      %253 = vmatprep.subr.mxu0 0.0
      %254 = vmatpush1.msra.mxu0 0.0
      %255 = vmatprep.subr.mxu0 0.0
      %256 = vmatpush1.msra.mxu0 %v223
      %257 = vmatprep.subr.mxu0 0.0
      %258 = vmatpush2.msra.mxu0 0.0
      %259 = vmatprep.subr.mxu0 0.0
      %260 = vmatpush2.msra.mxu0 0.0
      %261 = vmatprep.subr.mxu0 0.0
      %262 = vmatpush2.msra.mxu0 0.0
      %263 = vmatprep.subr.mxu0 0.0
      %264 = vmatpush2.msra.mxu0 0.0
      %265 = vmatprep.subr.mxu0 0.0
      %266 = vmatpush2.msra.mxu0 0.0
      %267 = vmatprep.subr.mxu0 0.0
      %268 = vmatpush2.msra.mxu0 0.0
      %269 = vmatprep.subr.mxu0 0.0
      %270 = vmatpush2.msra.mxu0 0.0
      %271 = vmatprep.subr.mxu0 0.0
      %272 = vmatpush2.msra.mxu0 0.0
      %273 = vmatprep.subr.mxu0 0.0
      %274 = vmatpush2.msra.mxu0 0.0
      %275 = vmatprep.subr.mxu0 0.0
      %276 = vmatpush2.msra.mxu0 0.0
      %277 = vmatprep.subr.mxu0 0.0
      %278 = vmatpush2.msra.mxu0 0.0
      %279 = vmatprep.subr.mxu0 0.0
      %280 = vmatpush2.msra.mxu0 0.0
      %281 = vmatprep.subr.mxu0 0.0
      %282 = vmatpush2.msra.mxu0 0.0
      %283 = vmatprep.subr.mxu0 0.0
      %284 = vmatpush2.msra.mxu0 0.0
      %285 = vmatprep.subr.mxu0 0.0
      %286 = vmatpush2.msra.mxu0 0.0
      %287 = vmatprep.subr.mxu0 0.0
      %288 = vmatpush2.msra.mxu0 0.0
      %289 = vmatprep.mubr.f32.mxu0 0.0
      %290 = vmatmul.mubr.f32.gmra.mxu0 %v219
      %v291 = vpop.f32.mrf.mxu0
      %v292 = vadd.f32 %v216, %v291
      %v293 = vpop.f32.mrf.mxu0
      %294 = vdwg.mxu0
      %v295 = vmul.f32 %v292, 1.442695
      %v296 = vpow.pop %v295
      %v297 = vmul.f32 %v296, %v206
      %vm298 = vcmask 519168
      %v299 = vsel %vm298, %v297, 0.0
      %v300 = vrot.slane %v299, 4
      %v301 = vadd.f32 %v299, %v300
      %v302 = vrot.slane %v301, 2
      %v303 = vadd.f32 %v301, %v302
      %v304 = vrot.slane %v303, 1
      %v305 = vadd.f32 %v303, %v304
      %v306 = vadd.f32 %v305, 1e-07
      %v307 = vmin.f32 %v306, 1.0
      %v308 = vlog2.pop %v307
      %v309 = vmul.f32 %v308, 0.6931472
      %vm310 = vcmask 523264
      %v311 = vsel %vm310, %v309, 0.0
      %312 = vadd.xlane.f32.xlu0 %v311
      %v313 = vpop.xlane.xlu0 %312
      %v314 = vadd.f32 %v313, 0.0
      %v315 = vld [vmem:[%s196 + $0x4] sm:$0x7]
      %v316 = vld [vmem:[%s191 + $0x4] sm:$0xf]
      %v317 = vmul.f32 %v315, %v315
      %v319 = vrot.slane %v315, 5
      %v321 = vsel %vm211, %v317, %v319
      %v323 = vsel %vm221, %v321, 0
      %325 = vmatprep.subr.mxu0 0.0
      %326 = vmatpush1.msra.mxu0 0.0
      %327 = vmatprep.subr.mxu0 0.0
      %328 = vmatpush1.msra.mxu0 0.0
      %329 = vmatprep.subr.mxu0 0.0
      %330 = vmatpush1.msra.mxu0 0.0
      %331 = vmatprep.subr.mxu0 0.0
      %332 = vmatpush1.msra.mxu0 0.0
      %333 = vmatprep.subr.mxu0 0.0
      %334 = vmatpush1.msra.mxu0 0.0
      %335 = vmatprep.subr.mxu0 0.0
      %336 = vmatpush1.msra.mxu0 0.0
      %337 = vmatprep.subr.mxu0 0.0
      %338 = vmatpush1.msra.mxu0 0.0
      %339 = vmatprep.subr.mxu0 0.0
      %340 = vmatpush1.msra.mxu0 0.0
      %341 = vmatprep.subr.mxu0 0.0
      %342 = vmatpush1.msra.mxu0 0.0
      %343 = vmatprep.subr.mxu0 0.0
      %344 = vmatpush1.msra.mxu0 0.0
      %345 = vmatprep.subr.mxu0 0.0
      %346 = vmatpush1.msra.mxu0 0.0
      %347 = vmatprep.subr.mxu0 0.0
      %348 = vmatpush1.msra.mxu0 0.0
      %349 = vmatprep.subr.mxu0 0.0
      %350 = vmatpush1.msra.mxu0 0.0
      %351 = vmatprep.subr.mxu0 0.0
      %352 = vmatpush1.msra.mxu0 0.0
      %353 = vmatprep.subr.mxu0 0.0
      %354 = vmatpush1.msra.mxu0 0.0
      %355 = vmatprep.subr.mxu0 0.0
      %356 = vmatpush1.msra.mxu0 %v323
      %357 = vmatprep.subr.mxu0 0.0
      %358 = vmatpush2.msra.mxu0 0.0
      %359 = vmatprep.subr.mxu0 0.0
      %360 = vmatpush2.msra.mxu0 0.0
      %361 = vmatprep.subr.mxu0 0.0
      %362 = vmatpush2.msra.mxu0 0.0
      %363 = vmatprep.subr.mxu0 0.0
      %364 = vmatpush2.msra.mxu0 0.0
      %365 = vmatprep.subr.mxu0 0.0
      %366 = vmatpush2.msra.mxu0 0.0
      %367 = vmatprep.subr.mxu0 0.0
      %368 = vmatpush2.msra.mxu0 0.0
      %369 = vmatprep.subr.mxu0 0.0
      %370 = vmatpush2.msra.mxu0 0.0
      %371 = vmatprep.subr.mxu0 0.0
      %372 = vmatpush2.msra.mxu0 0.0
      %373 = vmatprep.subr.mxu0 0.0
      %374 = vmatpush2.msra.mxu0 0.0
      %375 = vmatprep.subr.mxu0 0.0
      %376 = vmatpush2.msra.mxu0 0.0
      %377 = vmatprep.subr.mxu0 0.0
      %378 = vmatpush2.msra.mxu0 0.0
      %379 = vmatprep.subr.mxu0 0.0
      %380 = vmatpush2.msra.mxu0 0.0
      %381 = vmatprep.subr.mxu0 0.0
      %382 = vmatpush2.msra.mxu0 0.0
      %383 = vmatprep.subr.mxu0 0.0
      %384 = vmatpush2.msra.mxu0 0.0
      %385 = vmatprep.subr.mxu0 0.0
      %386 = vmatpush2.msra.mxu0 0.0
      %387 = vmatprep.subr.mxu0 0.0
      %388 = vmatpush2.msra.mxu0 0.0
      %389 = vmatprep.mubr.f32.mxu0 0.0
      %390 = vmatmul.mubr.f32.gmra.mxu0 %v219
      %v391 = vpop.f32.mrf.mxu0
      %v392 = vadd.f32 %v216, %v391
      %v393 = vpop.f32.mrf.mxu0
      %394 = vdwg.mxu0
      %v395 = vmul.f32 %v392, 1.442695
      %v396 = vpow.pop %v395
      %v397 = vmul.f32 %v396, %v316
      %v398 = vsel %vm298, %v397, 0.0
      %v399 = vrot.slane %v398, 4
      %v400 = vadd.f32 %v398, %v399
      %v401 = vrot.slane %v400, 2
      %v402 = vadd.f32 %v400, %v401
      %v403 = vrot.slane %v402, 1
      %v404 = vadd.f32 %v402, %v403
      %v405 = vadd.f32 %v404, 1e-07
      %v406 = vmin.f32 %v405, 1.0
      %v407 = vlog2.pop %v406
      %v408 = vmul.f32 %v407, 0.6931472
      %v409 = vsel %vm310, %v408, 0.0
      %410 = vadd.xlane.f32.xlu0 %v409
      %v411 = vpop.xlane.xlu0 %410
      %v412 = vadd.f32 %v314, %v411
      %v413 = vld [vmem:[%s196 + $0x8] sm:$0x7]
      %v414 = vld [vmem:[%s191 + $0x8] sm:$0xf]
      %v415 = vmul.f32 %v413, %v413
      %v417 = vrot.slane %v413, 5
      %v419 = vsel %vm211, %v415, %v417
      %v421 = vsel %vm221, %v419, 0
      %423 = vmatprep.subr.mxu0 0.0
      %424 = vmatpush1.msra.mxu0 0.0
      %425 = vmatprep.subr.mxu0 0.0
      %426 = vmatpush1.msra.mxu0 0.0
      %427 = vmatprep.subr.mxu0 0.0
      %428 = vmatpush1.msra.mxu0 0.0
      %429 = vmatprep.subr.mxu0 0.0
      %430 = vmatpush1.msra.mxu0 0.0
      %431 = vmatprep.subr.mxu0 0.0
      %432 = vmatpush1.msra.mxu0 0.0
      %433 = vmatprep.subr.mxu0 0.0
      %434 = vmatpush1.msra.mxu0 0.0
      %435 = vmatprep.subr.mxu0 0.0
      %436 = vmatpush1.msra.mxu0 0.0
      %437 = vmatprep.subr.mxu0 0.0
      %438 = vmatpush1.msra.mxu0 0.0
      %439 = vmatprep.subr.mxu0 0.0
      %440 = vmatpush1.msra.mxu0 0.0
      %441 = vmatprep.subr.mxu0 0.0
      %442 = vmatpush1.msra.mxu0 0.0
      %443 = vmatprep.subr.mxu0 0.0
      %444 = vmatpush1.msra.mxu0 0.0
      %445 = vmatprep.subr.mxu0 0.0
      %446 = vmatpush1.msra.mxu0 0.0
      %447 = vmatprep.subr.mxu0 0.0
      %448 = vmatpush1.msra.mxu0 0.0
      %449 = vmatprep.subr.mxu0 0.0
      %450 = vmatpush1.msra.mxu0 0.0
      %451 = vmatprep.subr.mxu0 0.0
      %452 = vmatpush1.msra.mxu0 0.0
      %453 = vmatprep.subr.mxu0 0.0
      %454 = vmatpush1.msra.mxu0 %v421
      %455 = vmatprep.subr.mxu0 0.0
      %456 = vmatpush2.msra.mxu0 0.0
      %457 = vmatprep.subr.mxu0 0.0
      %458 = vmatpush2.msra.mxu0 0.0
      %459 = vmatprep.subr.mxu0 0.0
      %460 = vmatpush2.msra.mxu0 0.0
      %461 = vmatprep.subr.mxu0 0.0
      %462 = vmatpush2.msra.mxu0 0.0
      %463 = vmatprep.subr.mxu0 0.0
      %464 = vmatpush2.msra.mxu0 0.0
      %465 = vmatprep.subr.mxu0 0.0
      %466 = vmatpush2.msra.mxu0 0.0
      %467 = vmatprep.subr.mxu0 0.0
      %468 = vmatpush2.msra.mxu0 0.0
      %469 = vmatprep.subr.mxu0 0.0
      %470 = vmatpush2.msra.mxu0 0.0
      %471 = vmatprep.subr.mxu0 0.0
      %472 = vmatpush2.msra.mxu0 0.0
      %473 = vmatprep.subr.mxu0 0.0
      %474 = vmatpush2.msra.mxu0 0.0
      %475 = vmatprep.subr.mxu0 0.0
      %476 = vmatpush2.msra.mxu0 0.0
      %477 = vmatprep.subr.mxu0 0.0
      %478 = vmatpush2.msra.mxu0 0.0
      %479 = vmatprep.subr.mxu0 0.0
      %480 = vmatpush2.msra.mxu0 0.0
      %481 = vmatprep.subr.mxu0 0.0
      %482 = vmatpush2.msra.mxu0 0.0
      %483 = vmatprep.subr.mxu0 0.0
      %484 = vmatpush2.msra.mxu0 0.0
      %485 = vmatprep.subr.mxu0 0.0
      %486 = vmatpush2.msra.mxu0 0.0
      %487 = vmatprep.mubr.f32.mxu0 0.0
      %488 = vmatmul.mubr.f32.gmra.mxu0 %v219
      %v489 = vpop.f32.mrf.mxu0
      %v490 = vadd.f32 %v216, %v489
      %v491 = vpop.f32.mrf.mxu0
      %492 = vdwg.mxu0
      %v493 = vmul.f32 %v490, 1.442695
      %v494 = vpow.pop %v493
      %v495 = vmul.f32 %v494, %v414
      %v496 = vsel %vm298, %v495, 0.0
      %v497 = vrot.slane %v496, 4
      %v498 = vadd.f32 %v496, %v497
      %v499 = vrot.slane %v498, 2
      %v500 = vadd.f32 %v498, %v499
      %v501 = vrot.slane %v500, 1
      %v502 = vadd.f32 %v500, %v501
      %v503 = vadd.f32 %v502, 1e-07
      %v504 = vmin.f32 %v503, 1.0
      %v505 = vlog2.pop %v504
      %v506 = vmul.f32 %v505, 0.6931472
      %v507 = vsel %vm310, %v506, 0.0
      %508 = vadd.xlane.f32.xlu0 %v507
      %v509 = vpop.xlane.xlu0 %508
      %v510 = vadd.f32 %v412, %v509
      %v511 = vld [vmem:[%s196 + $0xc] sm:$0x7]
      %v512 = vld [vmem:[%s191 + $0xc] sm:$0xf]
      %v513 = vmul.f32 %v511, %v511
      %v515 = vrot.slane %v511, 5
      %v517 = vsel %vm211, %v513, %v515
      %v519 = vsel %vm221, %v517, 0
      %521 = vmatprep.subr.mxu0 0.0
      %522 = vmatpush1.msra.mxu0 0.0
      %523 = vmatprep.subr.mxu0 0.0
      %524 = vmatpush1.msra.mxu0 0.0
      %525 = vmatprep.subr.mxu0 0.0
      %526 = vmatpush1.msra.mxu0 0.0
      %527 = vmatprep.subr.mxu0 0.0
      %528 = vmatpush1.msra.mxu0 0.0
      %529 = vmatprep.subr.mxu0 0.0
      %530 = vmatpush1.msra.mxu0 0.0
      %531 = vmatprep.subr.mxu0 0.0
      %532 = vmatpush1.msra.mxu0 0.0
      %533 = vmatprep.subr.mxu0 0.0
      %534 = vmatpush1.msra.mxu0 0.0
      %535 = vmatprep.subr.mxu0 0.0
      %536 = vmatpush1.msra.mxu0 0.0
      %537 = vmatprep.subr.mxu0 0.0
      %538 = vmatpush1.msra.mxu0 0.0
      %539 = vmatprep.subr.mxu0 0.0
      %540 = vmatpush1.msra.mxu0 0.0
      %541 = vmatprep.subr.mxu0 0.0
      %542 = vmatpush1.msra.mxu0 0.0
      %543 = vmatprep.subr.mxu0 0.0
      %544 = vmatpush1.msra.mxu0 0.0
      %545 = vmatprep.subr.mxu0 0.0
      %546 = vmatpush1.msra.mxu0 0.0
      %547 = vmatprep.subr.mxu0 0.0
      %548 = vmatpush1.msra.mxu0 0.0
      %549 = vmatprep.subr.mxu0 0.0
      %550 = vmatpush1.msra.mxu0 0.0
      %551 = vmatprep.subr.mxu0 0.0
      %552 = vmatpush1.msra.mxu0 %v519
      %553 = vmatprep.subr.mxu0 0.0
      %554 = vmatpush2.msra.mxu0 0.0
      %555 = vmatprep.subr.mxu0 0.0
      %556 = vmatpush2.msra.mxu0 0.0
      %557 = vmatprep.subr.mxu0 0.0
      %558 = vmatpush2.msra.mxu0 0.0
      %559 = vmatprep.subr.mxu0 0.0
      %560 = vmatpush2.msra.mxu0 0.0
      %561 = vmatprep.subr.mxu0 0.0
      %562 = vmatpush2.msra.mxu0 0.0
      %563 = vmatprep.subr.mxu0 0.0
      %564 = vmatpush2.msra.mxu0 0.0
      %565 = vmatprep.subr.mxu0 0.0
      %566 = vmatpush2.msra.mxu0 0.0
      %567 = vmatprep.subr.mxu0 0.0
      %568 = vmatpush2.msra.mxu0 0.0
      %569 = vmatprep.subr.mxu0 0.0
      %570 = vmatpush2.msra.mxu0 0.0
      %571 = vmatprep.subr.mxu0 0.0
      %572 = vmatpush2.msra.mxu0 0.0
      %573 = vmatprep.subr.mxu0 0.0
      %574 = vmatpush2.msra.mxu0 0.0
      %575 = vmatprep.subr.mxu0 0.0
      %576 = vmatpush2.msra.mxu0 0.0
      %577 = vmatprep.subr.mxu0 0.0
      %578 = vmatpush2.msra.mxu0 0.0
      %579 = vmatprep.subr.mxu0 0.0
      %580 = vmatpush2.msra.mxu0 0.0
      %581 = vmatprep.subr.mxu0 0.0
      %582 = vmatpush2.msra.mxu0 0.0
      %583 = vmatprep.subr.mxu0 0.0
      %584 = vmatpush2.msra.mxu0 0.0
      %585 = vmatprep.mubr.f32.mxu0 0.0
      %586 = vmatmul.mubr.f32.gmra.mxu0 %v219
      %v587 = vpop.f32.mrf.mxu0
      %v588 = vadd.f32 %v216, %v587
      %v589 = vpop.f32.mrf.mxu0
      %590 = vdwg.mxu0
      %v591 = vmul.f32 %v588, 1.442695
      %v592 = vpow.pop %v591
      %v593 = vmul.f32 %v592, %v512
      %v594 = vsel %vm298, %v593, 0.0
      %v595 = vrot.slane %v594, 4
      %v596 = vadd.f32 %v594, %v595
      %v597 = vrot.slane %v596, 2
      %v598 = vadd.f32 %v596, %v597
      %v599 = vrot.slane %v598, 1
      %v600 = vadd.f32 %v598, %v599
      %v601 = vadd.f32 %v600, 1e-07
      %v602 = vmin.f32 %v601, 1.0
      %v603 = vlog2.pop %v602
      %v604 = vmul.f32 %v603, 0.6931472
      %v605 = vsel %vm310, %v604, 0.0
      %606 = vadd.xlane.f32.xlu0 %v605
      %v607 = vpop.xlane.xlu0 %606
      %v608 = vadd.f32 %v510, %v607
      %vm609 = vcmask 0
      %610 = vst.msk [vmem:[%s203] sm:$0x1] %vm609, %v608
      %p611 = scmp.lt.s32.totalorder %s14, 1
      %s612 = scalar_select %p611, %s14, 1
      %s613 = scalar_lea.vmem %s3, %s612
      // Predicated region
      $region33: #{gmm_forward.3} parent=31 // pred_check
        %p614 = pneg %p110
      $region34: #{gmm_forward.3} parent=31 // pred_check_branch
        %616 = sbr.rel (%p614) target = $region36
      $region35: #{gmm_forward.3} parent=31 // pred_region
        _
      $region36: #{gmm_forward.3} parent=31 // pred_fallthru
        _
    $region32: #{gmm_forward.3} parent=5 // pred_fallthru
      _
    %p617 = scmp.le.s32.totalorder 2, %s9
    // Predicated region
    $region37: #{gmm_forward.3} parent=5 // pred_check
      %p618 = pneg %p617
    $region38: #{gmm_forward.3} parent=5 // pred_check_branch
      %620 = sbr.rel (%p618) target = $region40
    $region39: #{gmm_forward.3} parent=5 // pred_region
      %s621 = ssub.s32 %s9, 2
      // Predicated region
      $region41: #{gmm_forward.3} parent=39 // pred_check
        %p622 = pneg %p116
      $region42: #{gmm_forward.3} parent=39 // pred_check_branch
        %624 = sbr.rel (%p622) target = $region44
      $region43: #{gmm_forward.3} parent=39 // pred_region
        %p625 = scmp.lt.s32.totalorder %s15, 1
        %s626 = scalar_select %p625, %s15, 1
        %s627 = scalar_lea.vmem %s3, %s626
      $region44: #{gmm_forward.3} parent=39 // pred_fallthru
        _
    $region40: #{gmm_forward.3} parent=5 // pred_fallthru
      _
  $region6: #{gmm_forward.3} parent=0 // loop_footer
    %s13 = sadd.s32 1, %s9
  $region7: #{gmm_forward.3} parent=0 // loop_footer_branch
    %8 = sbr.rel target = $region3
  $region8: #{gmm_forward.3} parent=0 // loop_exit
    _

// kernel: gmm_forward.2
$region0: #{gmm_forward.2}
  #allocation0 [shape = 'u32[]', space=smem, size = 0x4, offset = 0x4, fixed_abs, tag = 'smem constant byte address 0x4 - core index']
  #allocation1 [shape = 'u32[144,128]{1,0:T(1,128)}', space=vmem, size = 0x12000, scoped, tag = 'internal scratch']
  %s0 = inlined_call_operand.vmem [shape: f32[2,16,64], index: 0, kind: input, shape index: {}]
  %s1 = inlined_call_operand.vmem [shape: f32[2,16,64], index: 1, kind: input, shape index: {}]
  %s2 = inlined_call_operand.vmem [shape: f32[2,12,64], index: 2, kind: input, shape index: {}]
  %s3 = inlined_call_operand.vmem [shape: f32[2,16,64], index: 3, kind: output, shape index: {0}]
  %s4 = inlined_call_operand.vmem [shape: f32[2,4,3], index: 4, kind: output, shape index: {1}]
  %s5 = inlined_call_operand.vmem [shape: f32[2,4,3], index: 5, kind: output, shape index: {2}]
  %6 = xla_tuple %s3, %s4, %s5
  %s7 = sld [smem:[#allocation0]]
  $region61: #{gmm_forward.2} parent=0
    _
  %s9 = ssub.s32 1, %s7
  %s10 = scalar_select 0, %s9, %s7
  loop: start=0, step=1, limit=4
  $region2: #{gmm_forward.2} parent=0 // loop_pre_header
    _
  $region3: #{gmm_forward.2} parent=0 // loop_header
    %s12 = sphi 0, %s16
    %p13 = scmp.ge.s32.totalorder %s12, 4
    %s22 = sphi 0, %s24
    %s25 = sphi 0, %s22
    %s26 = sphi 0, %s25
    %s42 = sphi 0, %s26
    %s48 = sphi 0, %s50
    %s51 = sphi 0, %s48
    %s52 = sphi 0, %s51
    %s68 = sphi 0, %s52
    %s74 = sphi 0, %s76
    %s77 = sphi 0, %s74
    %s78 = sphi 0, %s77
    %s94 = sphi 0, %s78
    %s100 = sphi 0, %s102
    %s103 = sphi 0, %s100
    %s104 = sphi 0, %s103
    %s120 = sphi 0, %s104
    %s126 = sphi 0, %s128
    %s129 = sphi 0, %s126
    %s130 = sphi 0, %s129
    %s146 = sphi 0, %s130
    %s152 = sphi 0, %s154
    %s155 = sphi 0, %s152
    %s156 = sphi 0, %s155
    %s172 = sphi 0, %s156
  $region4: #{gmm_forward.2} parent=0 // loop_header_branch
    %15 = sbr.rel (%p13) target = $region8
  $region5: #{gmm_forward.2} parent=0 // loop_body
    %s17 = ssub.s32 %s12, 1
    %s18 = ssub.s32 %s12, 2
    %s19 = sadd.s32 %s12, 1
    %s20 = ssub.s32 %s12, %s19
    %p21 = scmp.eq.s32.totalorder %s20, 0
    %s23 = sadd.s32 %s22, 1
    %s24 = scalar_select %p21, %s22, %s23
    %p27 = pneg %p21
    %p28 = scmp.eq.s32.totalorder %s12, 1
    %p29 = por %p27, %p28
    %p30 = scmp.ne.s32.totalorder %s22, %s25
    %p31 = scmp.eq.s32.totalorder %s12, 0
    %p32 = por %p30, %p31
    %p33 = scmp.ne.s32.totalorder %s22, %s25
    %p34 = scmp.eq.s32.totalorder %s17, 1
    %p35 = por %p33, %p34
    %p36 = scmp.ne.s32.totalorder %s25, %s26
    %p37 = scmp.eq.s32.totalorder %s17, 0
    %p38 = por %p36, %p37
    %p39 = scmp.ne.s32.totalorder %s25, %s26
    %p40 = scmp.eq.s32.totalorder %s18, 1
    %p41 = por %p39, %p40
    %p43 = scmp.ne.s32.totalorder %s26, %s42
    %p44 = scmp.eq.s32.totalorder %s18, 0
    %p45 = por %p43, %p44
    %s46 = ssub.s32 %s12, %s19
    %p47 = scmp.eq.s32.totalorder %s46, 0
    %s49 = sadd.s32 %s48, 1
    %s50 = scalar_select %p47, %s48, %s49
    %p53 = pneg %p47
    %p54 = scmp.eq.s32.totalorder %s12, 1
    %p55 = por %p53, %p54
    %p56 = scmp.ne.s32.totalorder %s48, %s51
    %p57 = scmp.eq.s32.totalorder %s12, 0
    %p58 = por %p56, %p57
    %p59 = scmp.ne.s32.totalorder %s48, %s51
    %p60 = scmp.eq.s32.totalorder %s17, 1
    %p61 = por %p59, %p60
    %p62 = scmp.ne.s32.totalorder %s51, %s52
    %p63 = scmp.eq.s32.totalorder %s17, 0
    %p64 = por %p62, %p63
    %p65 = scmp.ne.s32.totalorder %s51, %s52
    %p66 = scmp.eq.s32.totalorder %s18, 1
    %p67 = por %p65, %p66
    %p69 = scmp.ne.s32.totalorder %s52, %s68
    %p70 = scmp.eq.s32.totalorder %s18, 0
    %p71 = por %p69, %p70
    %s72 = ssub.s32 %s12, %s19
    %p73 = scmp.eq.s32.totalorder %s72, 0
    %s75 = sadd.s32 %s74, 1
    %s76 = scalar_select %p73, %s74, %s75
    %p79 = pneg %p73
    %p80 = scmp.eq.s32.totalorder %s12, 1
    %p81 = por %p79, %p80
    %p82 = scmp.ne.s32.totalorder %s74, %s77
    %p83 = scmp.eq.s32.totalorder %s12, 0
    %p84 = por %p82, %p83
    %p85 = scmp.ne.s32.totalorder %s74, %s77
    %p86 = scmp.eq.s32.totalorder %s17, 1
    %p87 = por %p85, %p86
    %p88 = scmp.ne.s32.totalorder %s77, %s78
    %p89 = scmp.eq.s32.totalorder %s17, 0
    %p90 = por %p88, %p89
    %p91 = scmp.ne.s32.totalorder %s77, %s78
    %p92 = scmp.eq.s32.totalorder %s18, 1
    %p93 = por %p91, %p92
    %p95 = scmp.ne.s32.totalorder %s78, %s94
    %p96 = scmp.eq.s32.totalorder %s18, 0
    %p97 = por %p95, %p96
    %s98 = ssub.s32 %s12, %s19
    %p99 = scmp.eq.s32.totalorder %s98, 0
    %s101 = sadd.s32 %s100, 1
    %s102 = scalar_select %p99, %s100, %s101
    %p105 = pneg %p99
    %p106 = scmp.eq.s32.totalorder %s12, 1
    %p107 = por %p105, %p106
    %p108 = scmp.ne.s32.totalorder %s100, %s103
    %p109 = scmp.eq.s32.totalorder %s12, 0
    %p110 = por %p108, %p109
    %p111 = scmp.ne.s32.totalorder %s100, %s103
    %p112 = scmp.eq.s32.totalorder %s17, 1
    %p113 = por %p111, %p112
    %p114 = scmp.ne.s32.totalorder %s103, %s104
    %p115 = scmp.eq.s32.totalorder %s17, 0
    %p116 = por %p114, %p115
    %p117 = scmp.ne.s32.totalorder %s103, %s104
    %p118 = scmp.eq.s32.totalorder %s18, 1
    %p119 = por %p117, %p118
    %p121 = scmp.ne.s32.totalorder %s104, %s120
    %p122 = scmp.eq.s32.totalorder %s18, 0
    %p123 = por %p121, %p122
    %s124 = ssub.s32 %s12, %s19
    %p125 = scmp.eq.s32.totalorder %s124, 0
    %s127 = sadd.s32 %s126, 1
    %s128 = scalar_select %p125, %s126, %s127
    %p131 = pneg %p125
    %p132 = scmp.eq.s32.totalorder %s12, 1
    %p133 = por %p131, %p132
    %p134 = scmp.ne.s32.totalorder %s126, %s129
    %p135 = scmp.eq.s32.totalorder %s12, 0
    %p136 = por %p134, %p135
    %p137 = scmp.ne.s32.totalorder %s126, %s129
    %p138 = scmp.eq.s32.totalorder %s17, 1
    %p139 = por %p137, %p138
    %p140 = scmp.ne.s32.totalorder %s129, %s130
    %p141 = scmp.eq.s32.totalorder %s17, 0
    %p142 = por %p140, %p141
    %p143 = scmp.ne.s32.totalorder %s129, %s130
    %p144 = scmp.eq.s32.totalorder %s18, 1
    %p145 = por %p143, %p144
    %p147 = scmp.ne.s32.totalorder %s130, %s146
    %p148 = scmp.eq.s32.totalorder %s18, 0
    %p149 = por %p147, %p148
    %s150 = ssub.s32 %s12, %s19
    %p151 = scmp.eq.s32.totalorder %s150, 0
    %s153 = sadd.s32 %s152, 1
    %s154 = scalar_select %p151, %s152, %s153
    %p157 = pneg %p151
    %p158 = scmp.eq.s32.totalorder %s12, 1
    %p159 = por %p157, %p158
    %p160 = scmp.ne.s32.totalorder %s152, %s155
    %p161 = scmp.eq.s32.totalorder %s12, 0
    %p162 = por %p160, %p161
    %p163 = scmp.ne.s32.totalorder %s152, %s155
    %p164 = scmp.eq.s32.totalorder %s17, 1
    %p165 = por %p163, %p164
    %p166 = scmp.ne.s32.totalorder %s155, %s156
    %p167 = scmp.eq.s32.totalorder %s17, 0
    %p168 = por %p166, %p167
    %p169 = scmp.ne.s32.totalorder %s155, %s156
    %p170 = scmp.eq.s32.totalorder %s18, 1
    %p171 = por %p169, %p170
    %p173 = scmp.ne.s32.totalorder %s156, %s172
    %p174 = scmp.eq.s32.totalorder %s18, 0
    %p175 = por %p173, %p174
    %p176 = scmp.le.s32.totalorder 1, %s12
    %p177 = scmp.lt.s32.totalorder %s12, 3
    %p178 = pnand %p176, %p177
    %p179 = pneg %p178
    // Predicated region
    $region9: #{gmm_forward.2} parent=5 // pred_check
      _
    $region10: #{gmm_forward.2} parent=5 // pred_check_branch
      %181 = sbr.rel (%p178) target = $region12
    $region11: #{gmm_forward.2} parent=5 // pred_region
      %s182 = ssub.s32 %s12, 1
    $region12: #{gmm_forward.2} parent=5 // pred_fallthru
      _
    %p183 = scmp.lt.s32.totalorder %s12, 2
    // Predicated region
    $region13: #{gmm_forward.2} parent=5 // pred_check
      %p184 = pneg %p183
    $region14: #{gmm_forward.2} parent=5 // pred_check_branch
      %186 = sbr.rel (%p184) target = $region16
    $region15: #{gmm_forward.2} parent=5 // pred_region
      // Predicated region
      $region17: #{gmm_forward.2} parent=15 // pred_check
        %p187 = pneg %p32
      $region18: #{gmm_forward.2} parent=15 // pred_check_branch
        %189 = sbr.rel (%p187) target = $region20
      $region19: #{gmm_forward.2} parent=15 // pred_region
        %p190 = scmp.lt.s32.totalorder %s12, 1
        %s191 = scalar_select %p190, %s12, 1
        %s192 = smul.addr %s191, 2
        %s193 = smul.addr %s192, 8
        %s194 = scalar_lea.vmem %s0, %s193
      $region20: #{gmm_forward.2} parent=15 // pred_fallthru
        _
      // Predicated region
      $region21: #{gmm_forward.2} parent=15 // pred_check
        %p195 = pneg %p58
      $region22: #{gmm_forward.2} parent=15 // pred_check_branch
        %197 = sbr.rel (%p195) target = $region24
      $region23: #{gmm_forward.2} parent=15 // pred_region
        %p198 = scmp.lt.s32.totalorder %s12, 1
        %s199 = scalar_select %p198, %s12, 1
        %s200 = smul.addr %s199, 2
        %s201 = smul.addr %s200, 8
        %s202 = scalar_lea.vmem %s1, %s201
      $region24: #{gmm_forward.2} parent=15 // pred_fallthru
        _
      // Predicated region
      $region25: #{gmm_forward.2} parent=15 // pred_check
        %p203 = pneg %p84
      $region26: #{gmm_forward.2} parent=15 // pred_check_branch
        %205 = sbr.rel (%p203) target = $region28
      $region27: #{gmm_forward.2} parent=15 // pred_region
        %p206 = scmp.lt.s32.totalorder %s12, 1
        %s207 = scalar_select %p206, %s12, 1
        %s208 = smul.addr %s207, 2
        %s209 = smul.addr %s208, 8
        %s210 = scalar_lea.vmem %s2, %s209
      $region28: #{gmm_forward.2} parent=15 // pred_fallthru
        _
    $region16: #{gmm_forward.2} parent=5 // pred_fallthru
      _
    %p211 = scmp.le.s32.totalorder 1, %s12
    %p212 = scmp.lt.s32.totalorder %s12, 3
    %p213 = pnand %p211, %p212
    %p214 = pneg %p213
    // Predicated region
    $region29: #{gmm_forward.2} parent=5 // pred_check
      _
    $region30: #{gmm_forward.2} parent=5 // pred_check_branch
      %216 = sbr.rel (%p213) target = $region32
    $region31: #{gmm_forward.2} parent=5 // pred_region
      %s217 = ssub.s32 %s12, 1
      %p218 = scmp.lt.s32.totalorder %s17, 1
      %s219 = scalar_select %p218, %s17, 1
      %s220 = smul.addr %s219, 2
      %s221 = smul.addr %s220, 8
      %s222 = scalar_lea.vmem %s0, %s221
      %p223 = pneg %p38
      %p224 = pneg %p35
      %p225 = scmp.lt.s32.totalorder %s17, 1
      %s226 = scalar_select %p225, %s17, 1
      %s227 = smul.addr %s226, 2
      %s228 = smul.addr %s227, 8
      %s229 = scalar_lea.vmem %s1, %s228
      %p230 = pneg %p64
      %p231 = pneg %p61
      %p232 = scmp.lt.s32.totalorder %s17, 1
      %s233 = scalar_select %p232, %s17, 1
      %s234 = smul.addr %s233, 2
      %s235 = smul.addr %s234, 8
      %s236 = scalar_lea.vmem %s2, %s235
      %p237 = pneg %p90
      %p238 = pneg %p87
      %p239 = pneg %p116
      %p240 = pneg %p113
      %p241 = scmp.lt.s32.totalorder %s17, 1
      %s242 = scalar_select %p241, %s17, 1
      %s243 = smul.addr %s242, 2
      %s244 = smul.addr %s243, 8
      %s245 = scalar_lea.vmem %s3, %s244
      %p246 = pneg %p142
      %p247 = pneg %p139
      %p248 = scmp.lt.s32.totalorder %s17, 1
      %s249 = scalar_select %p248, %s17, 1
      %s250 = smul.addr %s249, 4
      %s251 = scalar_lea.vmem %s4, %s250
      %p252 = pneg %p168
      %p253 = pneg %p165
      %p254 = scmp.lt.s32.totalorder %s17, 1
      %s255 = scalar_select %p254, %s17, 1
      %s256 = smul.addr %s255, 4
      %s257 = scalar_lea.vmem %s5, %s256
      %p258 = scmp.lt.s32.totalorder %s17, 1
      %s259 = scalar_select %p258, %s17, 1
      %s260 = smul.addr %s259, 2
      %s261 = smul.addr %s260, 8
      %s262 = scalar_lea.vmem %s0, %s261
      %p263 = scmp.lt.s32.totalorder %s17, 1
      %s264 = scalar_select %p263, %s17, 1
      %s265 = smul.addr %s264, 2
      %s266 = smul.addr %s265, 8
      %s267 = scalar_lea.vmem %s1, %s266
      %p268 = scmp.lt.s32.totalorder %s17, 1
      %s269 = scalar_select %p268, %s17, 1
      %s270 = smul.addr %s269, 2
      %s271 = smul.addr %s270, 8
      %s272 = scalar_lea.vmem %s2, %s271
      %p273 = scmp.lt.s32.totalorder %s17, 1
      %s274 = scalar_select %p273, %s17, 1
      %s275 = smul.addr %s274, 2
      %s276 = smul.addr %s275, 8
      %s277 = scalar_lea.vmem %s3, %s276
      %p278 = scmp.lt.s32.totalorder %s17, 1
      %s279 = scalar_select %p278, %s17, 1
      %s280 = smul.addr %s279, 4
      %s281 = scalar_lea.vmem %s4, %s280
      %p282 = scmp.lt.s32.totalorder %s17, 1
      %s283 = scalar_select %p282, %s17, 1
      %s284 = smul.addr %s283, 4
      %s285 = scalar_lea.vmem %s5, %s284
      %v286 = vld [vmem:[%s262] sm:$0xf]
      %vm287 = vcmask 519168
      %v288 = vsel %vm287, %v286, -inf
      %v289 = vrot.slane %v288, 4
      %v290 = vmax.f32 %v288, %v289
      %v291 = vrot.slane %v290, 2
      %v292 = vmax.f32 %v290, %v291
      %v293 = vrot.slane %v292, 1
      %v294 = vmax.f32 %v292, %v293
      %v295 = vsub.f32 %v286, %v294
      %v296 = vmul.f32 %v295, 1.442695
      %v297 = vpow.pop %v296
      %v298 = vsel %vm287, %v297, 0.0
      %v299 = vrot.slane %v298, 4
      %v300 = vadd.f32 %v298, %v299
      %v301 = vrot.slane %v300, 2
      %v302 = vadd.f32 %v300, %v301
      %v303 = vrot.slane %v302, 1
      %v304 = vadd.f32 %v302, %v303
      %v305 = vrcp.pop %v304
      %v306 = vmul.f32 %v297, %v305
      %307 = vst.msk [vmem:[%s277] sm:$0xf] %vm287, %v306
      %v308 = vld [vmem:[%s267] sm:$0xf]
      %vm309 = vcmask 523264
      %v311 = vsel %vm309, %v306, 0
      %v314 = vsel %vm309, %v308, 0
      %316 = vmatprep.subr.mxu0 0.0
      %317 = vmatpush1.xpose.msra.mxu0 0.0
      %318 = vmatprep.subr.mxu0 0.0
      %319 = vmatpush1.xpose.msra.mxu0 0.0
      %320 = vmatprep.subr.mxu0 0.0
      %321 = vmatpush1.xpose.msra.mxu0 0.0
      %322 = vmatprep.subr.mxu0 0.0
      %323 = vmatpush1.xpose.msra.mxu0 0.0
      %324 = vmatprep.subr.mxu0 0.0
      %325 = vmatpush1.xpose.msra.mxu0 0.0
      %326 = vmatprep.subr.mxu0 0.0
      %327 = vmatpush1.xpose.msra.mxu0 0.0
      %328 = vmatprep.subr.mxu0 0.0
      %329 = vmatpush1.xpose.msra.mxu0 0.0
      %330 = vmatprep.subr.mxu0 0.0
      %331 = vmatpush1.xpose.msra.mxu0 0.0
      %332 = vmatprep.subr.mxu0 0.0
      %333 = vmatpush1.xpose.msra.mxu0 0.0
      %334 = vmatprep.subr.mxu0 0.0
      %335 = vmatpush1.xpose.msra.mxu0 0.0
      %336 = vmatprep.subr.mxu0 0.0
      %337 = vmatpush1.xpose.msra.mxu0 0.0
      %338 = vmatprep.subr.mxu0 0.0
      %339 = vmatpush1.xpose.msra.mxu0 0.0
      %340 = vmatprep.subr.mxu0 0.0
      %341 = vmatpush1.xpose.msra.mxu0 0.0
      %342 = vmatprep.subr.mxu0 0.0
      %343 = vmatpush1.xpose.msra.mxu0 0.0
      %344 = vmatprep.subr.mxu0 0.0
      %345 = vmatpush1.xpose.msra.mxu0 0.0
      %346 = vmatprep.subr.mxu0 0.0
      %347 = vmatpush1.xpose.msra.mxu0 %v314
      %348 = vmatprep.subr.mxu0 0.0
      %349 = vmatpush2.xpose.msra.mxu0 0.0
      %350 = vmatprep.subr.mxu0 0.0
      %351 = vmatpush2.xpose.msra.mxu0 0.0
      %352 = vmatprep.subr.mxu0 0.0
      %353 = vmatpush2.xpose.msra.mxu0 0.0
      %354 = vmatprep.subr.mxu0 0.0
      %355 = vmatpush2.xpose.msra.mxu0 0.0
      %356 = vmatprep.subr.mxu0 0.0
      %357 = vmatpush2.xpose.msra.mxu0 0.0
      %358 = vmatprep.subr.mxu0 0.0
      %359 = vmatpush2.xpose.msra.mxu0 0.0
      %360 = vmatprep.subr.mxu0 0.0
      %361 = vmatpush2.xpose.msra.mxu0 0.0
      %362 = vmatprep.subr.mxu0 0.0
      %363 = vmatpush2.xpose.msra.mxu0 0.0
      %364 = vmatprep.subr.mxu0 0.0
      %365 = vmatpush2.xpose.msra.mxu0 0.0
      %366 = vmatprep.subr.mxu0 0.0
      %367 = vmatpush2.xpose.msra.mxu0 0.0
      %368 = vmatprep.subr.mxu0 0.0
      %369 = vmatpush2.xpose.msra.mxu0 0.0
      %370 = vmatprep.subr.mxu0 0.0
      %371 = vmatpush2.xpose.msra.mxu0 0.0
      %372 = vmatprep.subr.mxu0 0.0
      %373 = vmatpush2.xpose.msra.mxu0 0.0
      %374 = vmatprep.subr.mxu0 0.0
      %375 = vmatpush2.xpose.msra.mxu0 0.0
      %376 = vmatprep.subr.mxu0 0.0
      %377 = vmatpush2.xpose.msra.mxu0 0.0
      %378 = vmatprep.subr.mxu0 0.0
      %379 = vmatpush2.xpose.msra.mxu0 0.0
      %380 = vmatprep.mubr.f32.mxu0 0.0
      %381 = vmatmul.mubr.f32.gmra.mxu0 %v311
      %v382 = vpop.f32.mrf.mxu0
      %v383 = vadd.f32 0.0, %v382
      %v384 = vpop.f32.mrf.mxu0
      %385 = vdwg.mxu0
      %v386 = vld [vmem:[%s272] sm:$0xf]
      %v387 = vmul.f32 %v306, %v386
      %v388 = vsel %vm287, %v387, 0.0
      %389 = vadd.xlane.f32.xlu0 %v388
      %v390 = vpop.xlane.xlu0 %389
      %v391 = vmul.f32 %v387, %v386
      %v392 = vsel %vm287, %v391, 0.0
      %393 = vadd.xlane.f32.xlu0 %v392
      %v394 = vpop.xlane.xlu0 %393
      %v395 = vld [vmem:[%s272 + $0x4] sm:$0xf]
      %v396 = vmul.f32 %v306, %v395
      %v397 = vsel %vm287, %v396, 0.0
      %398 = vadd.xlane.f32.xlu0 %v397
      %v399 = vpop.xlane.xlu0 %398
      %v400 = vmul.f32 %v396, %v395
      %v401 = vsel %vm287, %v400, 0.0
      %402 = vadd.xlane.f32.xlu0 %v401
      %v403 = vpop.xlane.xlu0 %402
      %v404 = vld [vmem:[%s272 + $0x8] sm:$0xf]
      %v405 = vmul.f32 %v306, %v404
      %v406 = vsel %vm287, %v405, 0.0
      %407 = vadd.xlane.f32.xlu0 %v406
      %v408 = vpop.xlane.xlu0 %407
      %v409 = vmul.f32 %v405, %v404
      %v410 = vsel %vm287, %v409, 0.0
      %411 = vadd.xlane.f32.xlu0 %v410
      %v412 = vpop.xlane.xlu0 %411
      %v413 = vld [vmem:[%s262 + $0x4] sm:$0xf]
      %v414 = vsel %vm287, %v413, -inf
      %v415 = vrot.slane %v414, 4
      %v416 = vmax.f32 %v414, %v415
      %v417 = vrot.slane %v416, 2
      %v418 = vmax.f32 %v416, %v417
      %v419 = vrot.slane %v418, 1
      %v420 = vmax.f32 %v418, %v419
      %v421 = vsub.f32 %v413, %v420
      %v422 = vmul.f32 %v421, 1.442695
      %v423 = vpow.pop %v422
      %v424 = vsel %vm287, %v423, 0.0
      %v425 = vrot.slane %v424, 4
      %v426 = vadd.f32 %v424, %v425
      %v427 = vrot.slane %v426, 2
      %v428 = vadd.f32 %v426, %v427
      %v429 = vrot.slane %v428, 1
      %v430 = vadd.f32 %v428, %v429
      %v431 = vrcp.pop %v430
      %v432 = vmul.f32 %v423, %v431
      %433 = vst.msk [vmem:[%s277 + $0x4] sm:$0xf] %vm287, %v432
      %v434 = vld [vmem:[%s267 + $0x4] sm:$0xf]
      %v436 = vsel %vm309, %v432, 0
      %v439 = vsel %vm309, %v434, 0
      %441 = vmatprep.subr.mxu0 0.0
      %442 = vmatpush1.xpose.msra.mxu0 0.0
      %443 = vmatprep.subr.mxu0 0.0
      %444 = vmatpush1.xpose.msra.mxu0 0.0
      %445 = vmatprep.subr.mxu0 0.0
      %446 = vmatpush1.xpose.msra.mxu0 0.0
      %447 = vmatprep.subr.mxu0 0.0
      %448 = vmatpush1.xpose.msra.mxu0 0.0
      %449 = vmatprep.subr.mxu0 0.0
      %450 = vmatpush1.xpose.msra.mxu0 0.0
      %451 = vmatprep.subr.mxu0 0.0
      %452 = vmatpush1.xpose.msra.mxu0 0.0
      %453 = vmatprep.subr.mxu0 0.0
      %454 = vmatpush1.xpose.msra.mxu0 0.0
      %455 = vmatprep.subr.mxu0 0.0
      %456 = vmatpush1.xpose.msra.mxu0 0.0
      %457 = vmatprep.subr.mxu0 0.0
      %458 = vmatpush1.xpose.msra.mxu0 0.0
      %459 = vmatprep.subr.mxu0 0.0
      %460 = vmatpush1.xpose.msra.mxu0 0.0
      %461 = vmatprep.subr.mxu0 0.0
      %462 = vmatpush1.xpose.msra.mxu0 0.0
      %463 = vmatprep.subr.mxu0 0.0
      %464 = vmatpush1.xpose.msra.mxu0 0.0
      %465 = vmatprep.subr.mxu0 0.0
      %466 = vmatpush1.xpose.msra.mxu0 0.0
      %467 = vmatprep.subr.mxu0 0.0
      %468 = vmatpush1.xpose.msra.mxu0 0.0
      %469 = vmatprep.subr.mxu0 0.0
      %470 = vmatpush1.xpose.msra.mxu0 0.0
      %471 = vmatprep.subr.mxu0 0.0
      %472 = vmatpush1.xpose.msra.mxu0 %v439
      %473 = vmatprep.subr.mxu0 0.0
      %474 = vmatpush2.xpose.msra.mxu0 0.0
      %475 = vmatprep.subr.mxu0 0.0
      %476 = vmatpush2.xpose.msra.mxu0 0.0
      %477 = vmatprep.subr.mxu0 0.0
      %478 = vmatpush2.xpose.msra.mxu0 0.0
      %479 = vmatprep.subr.mxu0 0.0
      %480 = vmatpush2.xpose.msra.mxu0 0.0
      %481 = vmatprep.subr.mxu0 0.0
      %482 = vmatpush2.xpose.msra.mxu0 0.0
      %483 = vmatprep.subr.mxu0 0.0
      %484 = vmatpush2.xpose.msra.mxu0 0.0
      %485 = vmatprep.subr.mxu0 0.0
      %486 = vmatpush2.xpose.msra.mxu0 0.0
      %487 = vmatprep.subr.mxu0 0.0
      %488 = vmatpush2.xpose.msra.mxu0 0.0
      %489 = vmatprep.subr.mxu0 0.0
      %490 = vmatpush2.xpose.msra.mxu0 0.0
      %491 = vmatprep.subr.mxu0 0.0
      %492 = vmatpush2.xpose.msra.mxu0 0.0
      %493 = vmatprep.subr.mxu0 0.0
      %494 = vmatpush2.xpose.msra.mxu0 0.0
      %495 = vmatprep.subr.mxu0 0.0
      %496 = vmatpush2.xpose.msra.mxu0 0.0
      %497 = vmatprep.subr.mxu0 0.0
      %498 = vmatpush2.xpose.msra.mxu0 0.0
      %499 = vmatprep.subr.mxu0 0.0
      %500 = vmatpush2.xpose.msra.mxu0 0.0
      %501 = vmatprep.subr.mxu0 0.0
      %502 = vmatpush2.xpose.msra.mxu0 0.0
      %503 = vmatprep.subr.mxu0 0.0
      %504 = vmatpush2.xpose.msra.mxu0 0.0
      %505 = vmatprep.mubr.f32.mxu0 0.0
      %506 = vmatmul.mubr.f32.gmra.mxu0 %v436
      %v507 = vpop.f32.mrf.mxu0
      %v508 = vadd.f32 0.0, %v507
      %v509 = vpop.f32.mrf.mxu0
      %510 = vdwg.mxu0
      %v511 = vld [vmem:[%s272] sm:$0xf]
      %v512 = vmul.f32 %v432, %v511
      %v513 = vsel %vm287, %v512, 0.0
      %514 = vadd.xlane.f32.xlu0 %v513
      %v515 = vpop.xlane.xlu0 %514
      %v516 = vmul.f32 %v512, %v511
      %v517 = vsel %vm287, %v516, 0.0
      %518 = vadd.xlane.f32.xlu0 %v517
      %v519 = vpop.xlane.xlu0 %518
      %v520 = vadd.f32 %v394, %v519
      %v521 = vld [vmem:[%s272 + $0x4] sm:$0xf]
      %v522 = vmul.f32 %v432, %v521
      %v523 = vsel %vm287, %v522, 0.0
      %524 = vadd.xlane.f32.xlu0 %v523
      %v525 = vpop.xlane.xlu0 %524
      %v526 = vmul.f32 %v522, %v521
      %v527 = vsel %vm287, %v526, 0.0
      %528 = vadd.xlane.f32.xlu0 %v527
      %v529 = vpop.xlane.xlu0 %528
      %v530 = vadd.f32 %v403, %v529
      %v531 = vld [vmem:[%s272 + $0x8] sm:$0xf]
      %v532 = vmul.f32 %v432, %v531
      %v533 = vsel %vm287, %v532, 0.0
      %534 = vadd.xlane.f32.xlu0 %v533
      %v535 = vpop.xlane.xlu0 %534
      %v536 = vmul.f32 %v532, %v531
      %v537 = vsel %vm287, %v536, 0.0
      %538 = vadd.xlane.f32.xlu0 %v537
      %v539 = vpop.xlane.xlu0 %538
      %v540 = vadd.f32 %v412, %v539
      %v541 = vld [vmem:[%s262 + $0x8] sm:$0xf]
      %v542 = vsel %vm287, %v541, -inf
      %v543 = vrot.slane %v542, 4
      %v544 = vmax.f32 %v542, %v543
      %v545 = vrot.slane %v544, 2
      %v546 = vmax.f32 %v544, %v545
      %v547 = vrot.slane %v546, 1
      %v548 = vmax.f32 %v546, %v547
      %v549 = vsub.f32 %v541, %v548
      %v550 = vmul.f32 %v549, 1.442695
      %v551 = vpow.pop %v550
      %v552 = vsel %vm287, %v551, 0.0
      %v553 = vrot.slane %v552, 4
      %v554 = vadd.f32 %v552, %v553
      %v555 = vrot.slane %v554, 2
      %v556 = vadd.f32 %v554, %v555
      %v557 = vrot.slane %v556, 1
      %v558 = vadd.f32 %v556, %v557
      %v559 = vrcp.pop %v558
      %v560 = vmul.f32 %v551, %v559
      %561 = vst.msk [vmem:[%s277 + $0x8] sm:$0xf] %vm287, %v560
      %v562 = vld [vmem:[%s267 + $0x8] sm:$0xf]
      %v564 = vsel %vm309, %v560, 0
      %v567 = vsel %vm309, %v562, 0
      %569 = vmatprep.subr.mxu0 0.0
      %570 = vmatpush1.xpose.msra.mxu0 0.0
      %571 = vmatprep.subr.mxu0 0.0
      %572 = vmatpush1.xpose.msra.mxu0 0.0
      %573 = vmatprep.subr.mxu0 0.0
      %574 = vmatpush1.xpose.msra.mxu0 0.0
      %575 = vmatprep.subr.mxu0 0.0
      %576 = vmatpush1.xpose.msra.mxu0 0.0
      %577 = vmatprep.subr.mxu0 0.0
      %578 = vmatpush1.xpose.msra.mxu0 0.0
      %579 = vmatprep.subr.mxu0 0.0
      %580 = vmatpush1.xpose.msra.mxu0 0.0
      %581 = vmatprep.subr.mxu0 0.0
      %582 = vmatpush1.xpose.msra.mxu0 0.0
      %583 = vmatprep.subr.mxu0 0.0
      %584 = vmatpush1.xpose.msra.mxu0 0.0
      %585 = vmatprep.subr.mxu0 0.0
      %586 = vmatpush1.xpose.msra.mxu0 0.0
      %587 = vmatprep.subr.mxu0 0.0
      %588 = vmatpush1.xpose.msra.mxu0 0.0
      %589 = vmatprep.subr.mxu0 0.0
      %590 = vmatpush1.xpose.msra.mxu0 0.0
      %591 = vmatprep.subr.mxu0 0.0
      %592 = vmatpush1.xpose.msra.mxu0 0.0
      %593 = vmatprep.subr.mxu0 0.0
      %594 = vmatpush1.xpose.msra.mxu0 0.0
      %595 = vmatprep.subr.mxu0 0.0
      %596 = vmatpush1.xpose.msra.mxu0 0.0
      %597 = vmatprep.subr.mxu0 0.0
      %598 = vmatpush1.xpose.msra.mxu0 0.0
      %599 = vmatprep.subr.mxu0 0.0
      %600 = vmatpush1.xpose.msra.mxu0 %v567
      %601 = vmatprep.subr.mxu0 0.0
      %602 = vmatpush2.xpose.msra.mxu0 0.0
      %603 = vmatprep.subr.mxu0 0.0
      %604 = vmatpush2.xpose.msra.mxu0 0.0
      %605 = vmatprep.subr.mxu0 0.0
      %606 = vmatpush2.xpose.msra.mxu0 0.0
      %607 = vmatprep.subr.mxu0 0.0
      %608 = vmatpush2.xpose.msra.mxu0 0.0
      %609 = vmatprep.subr.mxu0 0.0
      %610 = vmatpush2.xpose.msra.mxu0 0.0
      %611 = vmatprep.subr.mxu0 0.0
      %612 = vmatpush2.xpose.msra.mxu0 0.0
      %613 = vmatprep.subr.mxu0 0.0
      %614 = vmatpush2.xpose.msra.mxu0 0.0
      %615 = vmatprep.subr.mxu0 0.0
      %616 = vmatpush2.xpose.msra.mxu0 0.0
      %617 = vmatprep.subr.mxu0 0.0
      %618 = vmatpush2.xpose.msra.mxu0 0.0
      %619 = vmatprep.subr.mxu0 0.0
      %620 = vmatpush2.xpose.msra.mxu0 0.0
      %621 = vmatprep.subr.mxu0 0.0
      %622 = vmatpush2.xpose.msra.mxu0 0.0
      %623 = vmatprep.subr.mxu0 0.0
      %624 = vmatpush2.xpose.msra.mxu0 0.0
      %625 = vmatprep.subr.mxu0 0.0
      %626 = vmatpush2.xpose.msra.mxu0 0.0
      %627 = vmatprep.subr.mxu0 0.0
      %628 = vmatpush2.xpose.msra.mxu0 0.0
      %629 = vmatprep.subr.mxu0 0.0
      %630 = vmatpush2.xpose.msra.mxu0 0.0
      %631 = vmatprep.subr.mxu0 0.0
      %632 = vmatpush2.xpose.msra.mxu0 0.0
      %633 = vmatprep.mubr.f32.mxu0 0.0
      %634 = vmatmul.mubr.f32.gmra.mxu0 %v564
      %v635 = vpop.f32.mrf.mxu0
      %v636 = vadd.f32 0.0, %v635
      %v637 = vpop.f32.mrf.mxu0
      %638 = vdwg.mxu0
      %v639 = vld [vmem:[%s272] sm:$0xf]
      %v640 = vmul.f32 %v560, %v639
      %v641 = vsel %vm287, %v640, 0.0
      %642 = vadd.xlane.f32.xlu0 %v641
      %v643 = vpop.xlane.xlu0 %642
      %v644 = vmul.f32 %v640, %v639
      %v645 = vsel %vm287, %v644, 0.0
      %646 = vadd.xlane.f32.xlu0 %v645
      %v647 = vpop.xlane.xlu0 %646
      %v648 = vadd.f32 %v520, %v647
      %v649 = vld [vmem:[%s272 + $0x4] sm:$0xf]
      %v650 = vmul.f32 %v560, %v649
      %v651 = vsel %vm287, %v650, 0.0
      %652 = vadd.xlane.f32.xlu0 %v651
      %v653 = vpop.xlane.xlu0 %652
      %v654 = vmul.f32 %v650, %v649
      %v655 = vsel %vm287, %v654, 0.0
      %656 = vadd.xlane.f32.xlu0 %v655
      %v657 = vpop.xlane.xlu0 %656
      %v658 = vadd.f32 %v530, %v657
      %v659 = vld [vmem:[%s272 + $0x8] sm:$0xf]
      %v660 = vmul.f32 %v560, %v659
      %v661 = vsel %vm287, %v660, 0.0
      %662 = vadd.xlane.f32.xlu0 %v661
      %v663 = vpop.xlane.xlu0 %662
      %v664 = vmul.f32 %v660, %v659
      %v665 = vsel %vm287, %v664, 0.0
      %666 = vadd.xlane.f32.xlu0 %v665
      %v667 = vpop.xlane.xlu0 %666
      %v668 = vadd.f32 %v540, %v667
      %v669 = vld [vmem:[%s262 + $0xc] sm:$0xf]
      %v670 = vsel %vm287, %v669, -inf
      %v671 = vrot.slane %v670, 4
      %v672 = vmax.f32 %v670, %v671
      %v673 = vrot.slane %v672, 2
      %v674 = vmax.f32 %v672, %v673
      %v675 = vrot.slane %v674, 1
      %v676 = vmax.f32 %v674, %v675
      %v677 = vsub.f32 %v669, %v676
      %v678 = vmul.f32 %v677, 1.442695
      %v679 = vpow.pop %v678
      %v680 = vsel %vm287, %v679, 0.0
      %v681 = vrot.slane %v680, 4
      %v682 = vadd.f32 %v680, %v681
      %v683 = vrot.slane %v682, 2
      %v684 = vadd.f32 %v682, %v683
      %v685 = vrot.slane %v684, 1
      %v686 = vadd.f32 %v684, %v685
      %v687 = vrcp.pop %v686
      %v688 = vmul.f32 %v679, %v687
      %689 = vst.msk [vmem:[%s277 + $0xc] sm:$0xf] %vm287, %v688
      %v690 = vld [vmem:[%s267 + $0xc] sm:$0xf]
      %v692 = vsel %vm309, %v688, 0
      %v695 = vsel %vm309, %v690, 0
      %697 = vmatprep.subr.mxu0 0.0
      %698 = vmatpush1.xpose.msra.mxu0 0.0
      %699 = vmatprep.subr.mxu0 0.0
      %700 = vmatpush1.xpose.msra.mxu0 0.0
      %701 = vmatprep.subr.mxu0 0.0
      %702 = vmatpush1.xpose.msra.mxu0 0.0
      %703 = vmatprep.subr.mxu0 0.0
      %704 = vmatpush1.xpose.msra.mxu0 0.0
      %705 = vmatprep.subr.mxu0 0.0
      %706 = vmatpush1.xpose.msra.mxu0 0.0
      %707 = vmatprep.subr.mxu0 0.0
      %708 = vmatpush1.xpose.msra.mxu0 0.0
      %709 = vmatprep.subr.mxu0 0.0
      %710 = vmatpush1.xpose.msra.mxu0 0.0
      %711 = vmatprep.subr.mxu0 0.0
      %712 = vmatpush1.xpose.msra.mxu0 0.0
      %713 = vmatprep.subr.mxu0 0.0
      %714 = vmatpush1.xpose.msra.mxu0 0.0
      %715 = vmatprep.subr.mxu0 0.0
      %716 = vmatpush1.xpose.msra.mxu0 0.0
      %717 = vmatprep.subr.mxu0 0.0
      %718 = vmatpush1.xpose.msra.mxu0 0.0
      %719 = vmatprep.subr.mxu0 0.0
      %720 = vmatpush1.xpose.msra.mxu0 0.0
      %721 = vmatprep.subr.mxu0 0.0
      %722 = vmatpush1.xpose.msra.mxu0 0.0
      %723 = vmatprep.subr.mxu0 0.0
      %724 = vmatpush1.xpose.msra.mxu0 0.0
      %725 = vmatprep.subr.mxu0 0.0
      %726 = vmatpush1.xpose.msra.mxu0 0.0
      %727 = vmatprep.subr.mxu0 0.0
      %728 = vmatpush1.xpose.msra.mxu0 %v695
      %729 = vmatprep.subr.mxu0 0.0
      %730 = vmatpush2.xpose.msra.mxu0 0.0
      %731 = vmatprep.subr.mxu0 0.0
      %732 = vmatpush2.xpose.msra.mxu0 0.0
      %733 = vmatprep.subr.mxu0 0.0
      %734 = vmatpush2.xpose.msra.mxu0 0.0
      %735 = vmatprep.subr.mxu0 0.0
      %736 = vmatpush2.xpose.msra.mxu0 0.0
      %737 = vmatprep.subr.mxu0 0.0
      %738 = vmatpush2.xpose.msra.mxu0 0.0
      %739 = vmatprep.subr.mxu0 0.0
      %740 = vmatpush2.xpose.msra.mxu0 0.0
      %741 = vmatprep.subr.mxu0 0.0
      %742 = vmatpush2.xpose.msra.mxu0 0.0
      %743 = vmatprep.subr.mxu0 0.0
      %744 = vmatpush2.xpose.msra.mxu0 0.0
      %745 = vmatprep.subr.mxu0 0.0
      %746 = vmatpush2.xpose.msra.mxu0 0.0
      %747 = vmatprep.subr.mxu0 0.0
      %748 = vmatpush2.xpose.msra.mxu0 0.0
      %749 = vmatprep.subr.mxu0 0.0
      %750 = vmatpush2.xpose.msra.mxu0 0.0
      %751 = vmatprep.subr.mxu0 0.0
      %752 = vmatpush2.xpose.msra.mxu0 0.0
      %753 = vmatprep.subr.mxu0 0.0
      %754 = vmatpush2.xpose.msra.mxu0 0.0
      %755 = vmatprep.subr.mxu0 0.0
      %756 = vmatpush2.xpose.msra.mxu0 0.0
      %757 = vmatprep.subr.mxu0 0.0
      %758 = vmatpush2.xpose.msra.mxu0 0.0
      %759 = vmatprep.subr.mxu0 0.0
      %760 = vmatpush2.xpose.msra.mxu0 0.0
      %761 = vmatprep.mubr.f32.mxu0 0.0
      %762 = vmatmul.mubr.f32.gmra.mxu0 %v692
      %v763 = vpop.f32.mrf.mxu0
      %v764 = vadd.f32 0.0, %v763
      %v765 = vpop.f32.mrf.mxu0
      %766 = vdwg.mxu0
      %v767 = vld [vmem:[%s272] sm:$0xf]
      %v768 = vmul.f32 %v688, %v767
      %v769 = vsel %vm287, %v768, 0.0
      %770 = vadd.xlane.f32.xlu0 %v769
      %v771 = vpop.xlane.xlu0 %770
      %v772 = vmul.f32 %v768, %v767
      %v773 = vsel %vm287, %v772, 0.0
      %774 = vadd.xlane.f32.xlu0 %v773
      %v775 = vpop.xlane.xlu0 %774
      %v776 = vadd.f32 %v648, %v775
      %v777 = vld [vmem:[%s272 + $0x4] sm:$0xf]
      %v778 = vmul.f32 %v688, %v777
      %v779 = vsel %vm287, %v778, 0.0
      %780 = vadd.xlane.f32.xlu0 %v779
      %v781 = vpop.xlane.xlu0 %780
      %v782 = vmul.f32 %v778, %v777
      %v783 = vsel %vm287, %v782, 0.0
      %784 = vadd.xlane.f32.xlu0 %v783
      %v785 = vpop.xlane.xlu0 %784
      %v786 = vadd.f32 %v658, %v785
      %v787 = vld [vmem:[%s272 + $0x8] sm:$0xf]
      %v788 = vmul.f32 %v688, %v787
      %v789 = vsel %vm287, %v788, 0.0
      %790 = vadd.xlane.f32.xlu0 %v789
      %v791 = vpop.xlane.xlu0 %790
      %v792 = vmul.f32 %v788, %v787
      %v793 = vsel %vm287, %v792, 0.0
      %794 = vadd.xlane.f32.xlu0 %v793
      %v795 = vpop.xlane.xlu0 %794
      %v796 = vadd.f32 %v668, %v795
      %v797 = vadd.f32 %v383, 0.0
      %v798 = vadd.f32 %v797, %v508
      %v799 = vadd.f32 %v798, %v636
      %v800 = vadd.f32 %v799, %v764
      %v801 = vadd.f32 %v800, 1e-07
      %803 = vset.pattern.permute.xlu0 3
      %804 = vperm.xlu0 %803, %v801
      %v805 = vpop.permute.xlu0 %804
      %v807 = vrcp.pop %v805
      %v808 = vmul.f32 %v800, %v807
      %vm809 = vcmask 19456
      %810 = vst.msk [vmem:[%s281] sm:$0xf] %vm809, %v808
      %v811 = vlaneseq
      %v812 = vshrl.u32 %v811, 7
      %v813 = vsub.s32 0, %v812
      %v814 = vrot.slane %v808, %v813
      %v815 = vmul.f32 %v814, %v390
      %v816 = vadd.f32 %v815, 0.0
      %v817 = vmul.f32 %v808, %v808
      %v818 = vlaneseq
      %v819 = vshrl.u32 %v818, 7
      %v820 = vsub.s32 0, %v819
      %v821 = vrot.slane %v817, %v820
      %823 = vrot.lane.b32.xlu0 %v383, 125
      %v824 = vpop.permute.xlu0 %823
      %v826 = vmul.f32 %v821, %v824
      %v827 = vadd.f32 %v826, 0.0
      %v828 = vlaneseq
      %v829 = vshrl.u32 %v828, 7
      %v830 = vsub.s32 1, %v829
      %v831 = vrot.slane %v808, %v830
      %v832 = vmul.f32 %v831, %v515
      %v833 = vadd.f32 %v816, %v832
      %v834 = vlaneseq
      %v835 = vshrl.u32 %v834, 7
      %v836 = vsub.s32 1, %v835
      %v837 = vrot.slane %v817, %v836
      %839 = vrot.lane.b32.xlu0 %v508, 125
      %v840 = vpop.permute.xlu0 %839
      %v842 = vmul.f32 %v837, %v840
      %v843 = vadd.f32 %v827, %v842
      %v844 = vlaneseq
      %v845 = vshrl.u32 %v844, 7
      %v846 = vsub.s32 2, %v845
      %v847 = vrot.slane %v808, %v846
      %v848 = vmul.f32 %v847, %v643
      %v849 = vadd.f32 %v833, %v848
      %v850 = vlaneseq
      %v851 = vshrl.u32 %v850, 7
      %v852 = vsub.s32 2, %v851
      %v853 = vrot.slane %v817, %v852
      %855 = vrot.lane.b32.xlu0 %v636, 125
      %v856 = vpop.permute.xlu0 %855
      %v858 = vmul.f32 %v853, %v856
      %v859 = vadd.f32 %v843, %v858
      %v860 = vlaneseq
      %v861 = vshrl.u32 %v860, 7
      %v862 = vsub.s32 3, %v861
      %v863 = vrot.slane %v808, %v862
      %v864 = vmul.f32 %v863, %v771
      %v865 = vadd.f32 %v849, %v864
      %v866 = vlaneseq
      %v867 = vshrl.u32 %v866, 7
      %v868 = vsub.s32 3, %v867
      %v869 = vrot.slane %v817, %v868
      %871 = vrot.lane.b32.xlu0 %v764, 125
      %v872 = vpop.permute.xlu0 %871
      %v874 = vmul.f32 %v869, %v872
      %v875 = vadd.f32 %v859, %v874
      %v876 = vmul.f32 %v865, 2.0
      %v877 = vsub.f32 %v776, %v876
      %v878 = vadd.f32 %v877, %v875
      %v879 = vmax.f32 %v878, 0.0
      %880 = vrot.lane.b32.xlu0 %v801, 125
      %v881 = vpop.permute.xlu0 %880
      %v883 = vrcp.pop %v881
      %v884 = vmul.f32 %v879, %v883
      %v885 = vrsqrt.pop %v884
      %v886 = vmul.f32 %v884, %v885
      %vm887 = vcmp.eq.f32.partialorder %v884, inf
      %v888 = vsel %vm887, %v884, %v886
      %vm889 = vcmp.eq.f32.partialorder %v884, 0.0
      %v890 = vand.u32 %v884, 2147483648
      %v891 = vsel %vm889, %v890, %v888
      %v892 = vmul.f32 %v814, %v399
      %v893 = vadd.f32 %v892, 0.0
      %894 = vrot.lane.b32.xlu0 %v383, 126
      %v895 = vpop.permute.xlu0 %894
      %v897 = vmul.f32 %v821, %v895
      %v898 = vadd.f32 %v897, 0.0
      %v899 = vmul.f32 %v831, %v525
      %v900 = vadd.f32 %v893, %v899
      %901 = vrot.lane.b32.xlu0 %v508, 126
      %v902 = vpop.permute.xlu0 %901
      %v904 = vmul.f32 %v837, %v902
      %v905 = vadd.f32 %v898, %v904
      %v906 = vmul.f32 %v847, %v653
      %v907 = vadd.f32 %v900, %v906
      %908 = vrot.lane.b32.xlu0 %v636, 126
      %v909 = vpop.permute.xlu0 %908
      %v911 = vmul.f32 %v853, %v909
      %v912 = vadd.f32 %v905, %v911
      %v913 = vmul.f32 %v863, %v781
      %v914 = vadd.f32 %v907, %v913
      %915 = vrot.lane.b32.xlu0 %v764, 126
      %v916 = vpop.permute.xlu0 %915
      %v918 = vmul.f32 %v869, %v916
      %v919 = vadd.f32 %v912, %v918
      %v920 = vmul.f32 %v914, 2.0
      %v921 = vsub.f32 %v786, %v920
      %v922 = vadd.f32 %v921, %v919
      %v923 = vmax.f32 %v922, 0.0
      %924 = vrot.lane.b32.xlu0 %v801, 126
      %v925 = vpop.permute.xlu0 %924
      %v927 = vrcp.pop %v925
      %v928 = vmul.f32 %v923, %v927
      %v929 = vrsqrt.pop %v928
      %v930 = vmul.f32 %v928, %v929
      %vm931 = vcmp.eq.f32.partialorder %v928, inf
      %v932 = vsel %vm931, %v928, %v930
      %vm933 = vcmp.eq.f32.partialorder %v928, 0.0
      %v934 = vand.u32 %v928, 2147483648
      %v935 = vsel %vm933, %v934, %v932
      %v936 = vmul.f32 %v814, %v408
      %v937 = vadd.f32 %v936, 0.0
      %938 = vrot.lane.b32.xlu0 %v383, 127
      %v939 = vpop.permute.xlu0 %938
      %v941 = vmul.f32 %v821, %v939
      %v942 = vadd.f32 %v941, 0.0
      %v943 = vmul.f32 %v831, %v535
      %v944 = vadd.f32 %v937, %v943
      %945 = vrot.lane.b32.xlu0 %v508, 127
      %v946 = vpop.permute.xlu0 %945
      %v948 = vmul.f32 %v837, %v946
      %v949 = vadd.f32 %v942, %v948
      %v950 = vmul.f32 %v847, %v663
      %v951 = vadd.f32 %v944, %v950
      %952 = vrot.lane.b32.xlu0 %v636, 127
      %v953 = vpop.permute.xlu0 %952
      %v955 = vmul.f32 %v853, %v953
      %v956 = vadd.f32 %v949, %v955
      %v957 = vmul.f32 %v863, %v791
      %v958 = vadd.f32 %v951, %v957
      %959 = vrot.lane.b32.xlu0 %v764, 127
      %v960 = vpop.permute.xlu0 %959
      %v962 = vmul.f32 %v869, %v960
      %v963 = vadd.f32 %v956, %v962
      %v964 = vmul.f32 %v958, 2.0
      %v965 = vsub.f32 %v796, %v964
      %v966 = vadd.f32 %v965, %v963
      %v967 = vmax.f32 %v966, 0.0
      %968 = vrot.lane.b32.xlu0 %v801, 127
      %v969 = vpop.permute.xlu0 %968
      %v971 = vrcp.pop %v969
      %v972 = vmul.f32 %v967, %v971
      %v973 = vrsqrt.pop %v972
      %v974 = vmul.f32 %v972, %v973
      %vm975 = vcmp.eq.f32.partialorder %v972, inf
      %v976 = vsel %vm975, %v972, %v974
      %vm977 = vcmp.eq.f32.partialorder %v972, 0.0
      %v978 = vand.u32 %v972, 2147483648
      %v979 = vsel %vm977, %v978, %v976
      %vm980 = vcmask 7168
      %v981 = vsel %vm980, %v891, %v935
      %vm982 = vcmask 15360
      %v983 = vsel %vm982, %v981, %v979
      %984 = vst.msk [vmem:[%s285] sm:$0xf] %vm809, %v983
      %p985 = scmp.lt.s32.totalorder %s17, 1
      %s986 = scalar_select %p985, %s17, 1
      %s987 = smul.addr %s986, 2
      %s988 = smul.addr %s987, 8
      %s989 = scalar_lea.vmem %s3, %s988
      %p990 = scmp.lt.s32.totalorder %s17, 1
      %s991 = scalar_select %p990, %s17, 1
      %s992 = smul.addr %s991, 4
      %s993 = scalar_lea.vmem %s4, %s992
      %p994 = scmp.lt.s32.totalorder %s17, 1
      %s995 = scalar_select %p994, %s17, 1
      %s996 = smul.addr %s995, 4
      %s997 = scalar_lea.vmem %s5, %s996
      // Predicated region
      $region33: #{gmm_forward.2} parent=31 // pred_check
        %p998 = pneg %p113
      $region34: #{gmm_forward.2} parent=31 // pred_check_branch
        %1000 = sbr.rel (%p998) target = $region36
      $region35: #{gmm_forward.2} parent=31 // pred_region
        _
      $region36: #{gmm_forward.2} parent=31 // pred_fallthru
        _
      // Predicated region
      $region37: #{gmm_forward.2} parent=31 // pred_check
        %p1001 = pneg %p139
      $region38: #{gmm_forward.2} parent=31 // pred_check_branch
        %1003 = sbr.rel (%p1001) target = $region40
      $region39: #{gmm_forward.2} parent=31 // pred_region
        _
      $region40: #{gmm_forward.2} parent=31 // pred_fallthru
        _
      // Predicated region
      $region41: #{gmm_forward.2} parent=31 // pred_check
        %p1004 = pneg %p165
      $region42: #{gmm_forward.2} parent=31 // pred_check_branch
        %1006 = sbr.rel (%p1004) target = $region44
      $region43: #{gmm_forward.2} parent=31 // pred_region
        _
      $region44: #{gmm_forward.2} parent=31 // pred_fallthru
        _
    $region32: #{gmm_forward.2} parent=5 // pred_fallthru
      _
    %p1007 = scmp.le.s32.totalorder 2, %s12
    // Predicated region
    $region45: #{gmm_forward.2} parent=5 // pred_check
      %p1008 = pneg %p1007
    $region46: #{gmm_forward.2} parent=5 // pred_check_branch
      %1010 = sbr.rel (%p1008) target = $region48
    $region47: #{gmm_forward.2} parent=5 // pred_region
      %s1011 = ssub.s32 %s12, 2
      // Predicated region
      $region49: #{gmm_forward.2} parent=47 // pred_check
        %p1012 = pneg %p119
      $region50: #{gmm_forward.2} parent=47 // pred_check_branch
        %1014 = sbr.rel (%p1012) target = $region52
      $region51: #{gmm_forward.2} parent=47 // pred_region
        %p1015 = scmp.lt.s32.totalorder %s18, 1
        %s1016 = scalar_select %p1015, %s18, 1
        %s1017 = smul.addr %s1016, 2
        %s1018 = smul.addr %s1017, 8
        %s1019 = scalar_lea.vmem %s3, %s1018
      $region52: #{gmm_forward.2} parent=47 // pred_fallthru
        _
      // Predicated region
      $region53: #{gmm_forward.2} parent=47 // pred_check
        %p1020 = pneg %p145
      $region54: #{gmm_forward.2} parent=47 // pred_check_branch
        %1022 = sbr.rel (%p1020) target = $region56
      $region55: #{gmm_forward.2} parent=47 // pred_region
        %p1023 = scmp.lt.s32.totalorder %s18, 1
        %s1024 = scalar_select %p1023, %s18, 1
        %s1025 = smul.addr %s1024, 4
        %s1026 = scalar_lea.vmem %s4, %s1025
      $region56: #{gmm_forward.2} parent=47 // pred_fallthru
        _
      // Predicated region
      $region57: #{gmm_forward.2} parent=47 // pred_check
        %p1027 = pneg %p171
      $region58: #{gmm_forward.2} parent=47 // pred_check_branch
        %1029 = sbr.rel (%p1027) target = $region60
      $region59: #{gmm_forward.2} parent=47 // pred_region
        %p1030 = scmp.lt.s32.totalorder %s18, 1
        %s1031 = scalar_select %p1030, %s18, 1
        %s1032 = smul.addr %s1031, 4
        %s1033 = scalar_lea.vmem %s5, %s1032
      $region60: #{gmm_forward.2} parent=47 // pred_fallthru
        _
    $region48: #{gmm_forward.2} parent=5 // pred_fallthru
      _
  $region6: #{gmm_forward.2} parent=0 // loop_footer
    %s16 = sadd.s32 1, %s12
  $region7: #{gmm_forward.2} parent=0 // loop_footer_branch
    %11 = sbr.rel target = $region3
  $region8: #{gmm_forward.2} parent=0 // loop_exit
    _

</llo_original>
